<compile_context>
chip_gen: v5e
topology: v5e:2x2
jax: 0.10.0
libtpu: 0.0.40
codegen_flags: <defaults>
</compile_context>

<pallas_src>
import functools

import jax
import jax.numpy as jnp
import numpy as np
from jax import lax
from jax.experimental import pallas as pl
from jax.experimental.pallas import tpu as pltpu


# ----------------------------- Pallas kernel --------------------------------
def _lstm_fc_kernel(x_ref,            # (Ts, Bp, E)   embedded inputs (time-chunk), f32
                    wih1_ref,         # (E, 4H)       bf16
                    whh1_ref,         # (H, 4H)       bf16
                    b1_ref,           # (1, 4H)       f32, = b_ih1 + b_hh1
                    wih2_ref,         # (H, 4H)       bf16
                    whh2_ref,         # (H, 4H)       bf16
                    b2_ref,           # (1, 4H)       f32, = b_ih2 + b_hh2
                    wfc_ref,          # (H, V)        bf16
                    bfc_ref,          # (1, V)        f32
                    out_ref,          # (Ts, Bp, V)   logits (time-chunk), f32
                    h1, c1, h2, c2):  # VMEM scratch (Bp, H) f32 — carried across grid steps
    Ts, Bp, E = x_ref.shape
    H = h1.shape[1]
    V = out_ref.shape[2]
    bf16 = jnp.bfloat16

    # Zero the recurrent state only on the first time-chunk.
    @pl.when(pl.program_id(0) == 0)
    def _init():
        h1[...] = jnp.zeros_like(h1)
        c1[...] = jnp.zeros_like(c1)
        h2[...] = jnp.zeros_like(h2)
        c2[...] = jnp.zeros_like(c2)

    def act(g):   # PyTorch gate order i, f, g, o
        i = jax.nn.sigmoid(g[:, 0 * H:1 * H])
        f = jax.nn.sigmoid(g[:, 1 * H:2 * H])
        gg = jnp.tanh(g[:, 2 * H:3 * H])
        o = jax.nn.sigmoid(g[:, 3 * H:4 * H])
        return i, f, gg, o

    # ---- Layer 1: batched input projection for the whole chunk (one well-filled MXU op) ----
    x_all = x_ref[...].reshape(Ts * Bp, E).astype(bf16)
    g1_pre = (jnp.dot(x_all, wih1_ref[...], preferred_element_type=jnp.float32)
              + b1_ref[...]).reshape(Ts, Bp, 4 * H)

    whh1 = whh1_ref[...]
    h1v, c1v = h1[...], c1[...]
    h1_hist = []
    for t in range(Ts):                      # only the hidden matmul stays in the recurrence
        g1 = g1_pre[t] + jnp.dot(h1v.astype(bf16), whh1,
                                 preferred_element_type=jnp.float32)
        i1, f1, gg1, o1 = act(g1)
        c1v = f1 * c1v + i1 * gg1
        h1v = o1 * jnp.tanh(c1v)
        h1_hist.append(h1v)
    h1[...] = h1v
    c1[...] = c1v

    # ---- Layer 2: input projection hoisted out of the recurrence as well ----
    h1_all = jnp.concatenate(h1_hist, axis=0).astype(bf16)            # (Ts*Bp, H)
    g2_pre = (jnp.dot(h1_all, wih2_ref[...], preferred_element_type=jnp.float32)
              + b2_ref[...]).reshape(Ts, Bp, 4 * H)

    whh2 = whh2_ref[...]
    h2v, c2v = h2[...], c2[...]
    h2_hist = []
    for t in range(Ts):                      # per-step serial chain: one K=H matmul
        g2 = g2_pre[t] + jnp.dot(h2v.astype(bf16), whh2,
                                 preferred_element_type=jnp.float32)
        i2, f2, gg2, o2 = act(g2)
        c2v = f2 * c2v + i2 * gg2
        h2v = o2 * jnp.tanh(c2v)
        h2_hist.append(h2v)
    h2[...] = h2v
    c2[...] = c2v

    # ---- Batched final Linear over the chunk (Dropout(0.2) eval-mode identity) ----
    h2_all = jnp.concatenate(h2_hist, axis=0).astype(bf16)            # (Ts*Bp, H)
    logits = (jnp.dot(h2_all, wfc_ref[...], preferred_element_type=jnp.float32)
              + bfc_ref[...])
    out_ref[...] = logits.reshape(Ts, Bp, V)                          # one dense slab store


# --------------------- One-time parameter preparation -------------------------
def prepare_params(params):
    """Pre-transpose, fold biases, and cast weights to bf16 ONCE, outside the jitted forward."""
    H = params["whh1"].shape[0] // 4
    V = params["wfc"].shape[0]
    bf16 = jnp.bfloat16
    f32 = jnp.float32
    return {
        "embedding": jnp.asarray(params["embedding"], f32),                      # (V, E)
        "wih1": jnp.asarray(params["wih1"]).T.astype(bf16),                      # (E, 4H)
        "whh1": jnp.asarray(params["whh1"]).T.astype(bf16),                      # (H, 4H)
        "b1": (params["bih1"] + params["bhh1"]).reshape(1, 4 * H).astype(f32),
        "wih2": jnp.asarray(params["wih2"]).T.astype(bf16),                      # (H, 4H)
        "whh2": jnp.asarray(params["whh2"]).T.astype(bf16),                      # (H, 4H)
        "b2": (params["bih2"] + params["bhh2"]).reshape(1, 4 * H).astype(f32),
        "wfc": jnp.asarray(params["wfc"]).T.astype(bf16),                        # (H, V)
        "bfc": params["bfc"].reshape(1, V).astype(f32),
    }


# ------------------------------ Wrapper --------------------------------------
@functools.partial(jax.jit, static_argnames=("ts",))
def autocomplete_forward(token_ids, prep, ts=4):
    """token_ids: (B, S) int32.  Returns logits (B, S, vocab_size) float32."""
    emb = prep["embedding"]                   # (V, E)
    B, S = token_ids.shape
    _, E = emb.shape
    H = prep["whh1"].shape[0]
    V = prep["wfc"].shape[1]
    assert S % ts == 0, "sequence length must be a multiple of the time-tile"

    # Pad batch to a multiple of 8 sublanes so all vreg ops / stores are dense.
    Bp = ((B + 7) // 8) * 8

    # Time-major embedding gather: transpose the tiny id matrix (not the activation tensor).
    ids_t = jnp.transpose(token_ids)          # (S, B)
    x = jnp.take(emb, ids_t, axis=0)          # (S, B, E)
    if Bp != B:
        x = jnp.pad(x, ((0, 0), (0, Bp - B), (0, 0)))   # (S, Bp, E)

    grid = (S // ts,)
    out_sbv = pl.pallas_call(
        _lstm_fc_kernel,
        out_shape=jax.ShapeDtypeStruct((S, Bp, V), jnp.float32),
        grid=grid,
        in_specs=[
            pl.BlockSpec((ts, Bp, E), lambda s: (s, 0, 0)),       # x: tiled over time-chunks
            pl.BlockSpec((E, 4 * H), lambda s: (0, 0)),           # wih1 (resident)
            pl.BlockSpec((H, 4 * H), lambda s: (0, 0)),           # whh1
            pl.BlockSpec((1, 4 * H), lambda s: (0, 0)),           # b1
            pl.BlockSpec((H, 4 * H), lambda s: (0, 0)),           # wih2
            pl.BlockSpec((H, 4 * H), lambda s: (0, 0)),           # whh2
            pl.BlockSpec((1, 4 * H), lambda s: (0, 0)),           # b2
            pl.BlockSpec((H, V), lambda s: (0, 0)),               # wfc
            pl.BlockSpec((1, V), lambda s: (0, 0)),               # bfc
        ],
        out_specs=pl.BlockSpec((ts, Bp, V), lambda s: (s, 0, 0)),
        scratch_shapes=[
            pltpu.VMEM((Bp, H), jnp.float32),   # h1
            pltpu.VMEM((Bp, H), jnp.float32),   # c1
            pltpu.VMEM((Bp, H), jnp.float32),   # h2
            pltpu.VMEM((Bp, H), jnp.float32),   # c2
        ],
        compiler_params=pltpu.CompilerParams(
            dimension_semantics=("arbitrary",)),                  # recurrence is sequential
    )(x, prep["wih1"], prep["whh1"], prep["b1"], prep["wih2"], prep["whh2"],
      prep["b2"], prep["wfc"], prep["bfc"])

    # Drop batch padding, back to PyTorch's (B, S, V).
    return jnp.transpose(out_sbv[:, :B, :], (1, 0, 2))


# ------------------------- Pure-JAX reference ---------------------------------
def reference_forward(token_ids, params):
    emb = params["embedding"]
    H = params["whh1"].shape[0] // 4
    x = jnp.take(emb, token_ids, axis=0)      # (B, S, E)
    B, S, E = x.shape

    def run_layer(inp, wih, whh, bih, bhh):
        def cell(carry, x_t):
            h, c = carry
            g = x_t @ wih.T + bih + h @ whh.T + bhh
            i = jax.nn.sigmoid(g[:, 0 * H:1 * H])
            f = jax.nn.sigmoid(g[:, 1 * H:2 * H])
            gg = jnp.tanh(g[:, 2 * H:3 * H])
            o = jax.nn.sigmoid(g[:, 3 * H:4 * H])
            c = f * c + i * gg
            h = o * jnp.tanh(c)
            return (h, c), h
        h0 = jnp.zeros((B, H), jnp.float32)
        (_, _), hs = lax.scan(cell, (h0, h0), jnp.transpose(inp, (1, 0, 2)))
        return jnp.transpose(hs, (1, 0, 2))   # (B, S, H)

    h1 = run_layer(x, params["wih1"], params["whh1"], params["bih1"], params["bhh1"])
    h2 = run_layer(h1, params["wih2"], params["whh2"], params["bih2"], params["bhh2"])
    return h2 @ params["wfc"].T + params["bfc"]


# ------------------------------- Main -----------------------------------------
def init_params(key, vocab_size, embedding_dim, hidden_dim):
    ks = jax.random.split(key, 11)
    H = hidden_dim
    s = 1.0 / np.sqrt(H)
    u = lambda k, shape: jax.random.uniform(k, shape, jnp.float32, -s, s)
    return {
        "embedding": jax.random.normal(ks[0], (vocab_size, embedding_dim), jnp.float32),
        "wih1": u(ks[1], (4 * H, embedding_dim)),
        "whh1": u(ks[2], (4 * H, H)),
        "bih1": u(ks[3], (4 * H,)),
        "bhh1": u(ks[4], (4 * H,)),
        "wih2": u(ks[5], (4 * H, H)),
        "whh2": u(ks[6], (4 * H, H)),
        "bih2": u(ks[7], (4 * H,)),
        "bhh2": u(ks[8], (4 * H,)),
        "wfc": u(ks[9], (vocab_size, H)),
        "bfc": u(ks[10], (vocab_size,)),
    }


if __name__ == "__main__":
    VOCAB, EMBED, HIDDEN = 128, 64, 128
    B, S = 2, 8
    TS = 4   # time-tile: grid = S // TS = 2 chunks, exercising the cross-chunk state carry

    key = jax.random.PRNGKey(0)
    k_param, k_tok = jax.random.split(key)
    params = init_params(k_param, VOCAB, EMBED, HIDDEN)
    token_ids = jax.random.randint(k_tok, (B, S), 0, VOCAB, dtype=jnp.int32)

    prep = prepare_params(params)             # one-time weight prep (transpose + bf16 cast)
    logits = autocomplete_forward(token_ids, prep, ts=TS)
    logits = jax.block_until_ready(logits)

    ref = reference_forward(token_ids, params)
    assert logits.shape == (B, S, VOCAB), logits.shape
    # Tolerance loosened vs. the f32 version: MXU operands are bf16 (accumulation stays f32).
    np.testing.assert_allclose(np.asarray(logits), np.asarray(ref),
                               rtol=3e-2, atol=3e-2)
    print("KERNEL_OK")
</pallas_src>

<mosaic_0001>
module attributes {stable_mosaic.version = 11 : i64} {
  func.func @_lstm_fc_kernel(%arg0: i32, %arg1: memref<4x8x64xf32, #tpu.memory_space<vmem>>, %arg2: memref<64x512xbf16, #tpu.memory_space<vmem>>, %arg3: memref<128x512xbf16, #tpu.memory_space<vmem>>, %arg4: memref<1x512xf32, #tpu.memory_space<vmem>>, %arg5: memref<128x512xbf16, #tpu.memory_space<vmem>>, %arg6: memref<128x512xbf16, #tpu.memory_space<vmem>>, %arg7: memref<1x512xf32, #tpu.memory_space<vmem>>, %arg8: memref<128x128xbf16, #tpu.memory_space<vmem>>, %arg9: memref<1x128xf32, #tpu.memory_space<vmem>>, %arg10: memref<4x8x128xf32, #tpu.memory_space<vmem>>, %arg11: memref<8x128xf32, #tpu.memory_space<vmem>>, %arg12: memref<8x128xf32, #tpu.memory_space<vmem>>, %arg13: memref<8x128xf32, #tpu.memory_space<vmem>>, %arg14: memref<8x128xf32, #tpu.memory_space<vmem>>) attributes {dimension_semantics = [#tpu.dimension_semantics<arbitrary>], iteration_bounds = array<i64: 2>, scalar_prefetch = 0 : i64, scratch_operands = 4 : i64, tpu.core_type = #tpu.core_type<tc>, window_params = [{transform_indices = @transform_0, window_bounds = array<i64: 4, 8, 64>}, {pipeline_mode = #tpu.pipeline_mode<synchronous>, transform_indices = @transform_1, window_bounds = array<i64: 64, 512>}, {pipeline_mode = #tpu.pipeline_mode<synchronous>, transform_indices = @transform_2, window_bounds = array<i64: 128, 512>}, {pipeline_mode = #tpu.pipeline_mode<synchronous>, transform_indices = @transform_3, window_bounds = array<i64: 1, 512>}, {pipeline_mode = #tpu.pipeline_mode<synchronous>, transform_indices = @transform_4, window_bounds = array<i64: 128, 512>}, {pipeline_mode = #tpu.pipeline_mode<synchronous>, transform_indices = @transform_5, window_bounds = array<i64: 128, 512>}, {pipeline_mode = #tpu.pipeline_mode<synchronous>, transform_indices = @transform_6, window_bounds = array<i64: 1, 512>}, {pipeline_mode = #tpu.pipeline_mode<synchronous>, transform_indices = @transform_7, window_bounds = array<i64: 128, 128>}, {pipeline_mode = #tpu.pipeline_mode<synchronous>, transform_indices = @transform_8, window_bounds = array<i64: 1, 128>}, {transform_indices = @transform_9, window_bounds = array<i64: 4, 8, 128>}]} {
    %c0_i32 = arith.constant 0 : i32
    %0 = arith.cmpi eq, %arg0, %c0_i32 : i32
    %1 = arith.extui %0 : i1 to i32
    %c0_i32_0 = arith.constant 0 : i32
    %2 = arith.cmpi ne, %1, %c0_i32_0 : i32
    scf.if %2 {
      %cst_72 = arith.constant 0.000000e+00 : f32
      %279 = vector.broadcast %cst_72 : f32 to vector<8x128xf32>
      %c0_73 = arith.constant 0 : index
      %c0_74 = arith.constant 0 : index
      %280 = vector.load %arg11[%c0_73, %c0_74] : memref<8x128xf32, #tpu.memory_space<vmem>>, vector<8x128xf32>
      tpu.vector_store %arg11[%c0_73, %c0_74], %279 {strides = array<i32>} : memref<8x128xf32, #tpu.memory_space<vmem>>, vector<8x128xf32>,
      %cst_75 = arith.constant 0.000000e+00 : f32
      %281 = vector.broadcast %cst_75 : f32 to vector<8x128xf32>
      %c0_76 = arith.constant 0 : index
      %c0_77 = arith.constant 0 : index
      %282 = vector.load %arg12[%c0_76, %c0_77] : memref<8x128xf32, #tpu.memory_space<vmem>>, vector<8x128xf32>
      tpu.vector_store %arg12[%c0_76, %c0_77], %281 {strides = array<i32>} : memref<8x128xf32, #tpu.memory_space<vmem>>, vector<8x128xf32>,
      %cst_78 = arith.constant 0.000000e+00 : f32
      %283 = vector.broadcast %cst_78 : f32 to vector<8x128xf32>
      %c0_79 = arith.constant 0 : index
      %c0_80 = arith.constant 0 : index
      %284 = vector.load %arg13[%c0_79, %c0_80] : memref<8x128xf32, #tpu.memory_space<vmem>>, vector<8x128xf32>
      tpu.vector_store %arg13[%c0_79, %c0_80], %283 {strides = array<i32>} : memref<8x128xf32, #tpu.memory_space<vmem>>, vector<8x128xf32>,
      %cst_81 = arith.constant 0.000000e+00 : f32
      %285 = vector.broadcast %cst_81 : f32 to vector<8x128xf32>
      %c0_82 = arith.constant 0 : index
      %c0_83 = arith.constant 0 : index
      %286 = vector.load %arg14[%c0_82, %c0_83] : memref<8x128xf32, #tpu.memory_space<vmem>>, vector<8x128xf32>
      tpu.vector_store %arg14[%c0_82, %c0_83], %285 {strides = array<i32>} : memref<8x128xf32, #tpu.memory_space<vmem>>, vector<8x128xf32>,
    } else {
    }
    %c0 = arith.constant 0 : index
    %c0_1 = arith.constant 0 : index
    %c0_2 = arith.constant 0 : index
    %3 = vector.load %arg1[%c0, %c0_1, %c0_2] : memref<4x8x64xf32, #tpu.memory_space<vmem>>, vector<4x8x64xf32>
    %4 = vector.shape_cast %3 : vector<4x8x64xf32> to vector<32x64xf32>
    %5 = arith.truncf %4 : vector<32x64xf32> to vector<32x64xbf16>
    %c0_3 = arith.constant 0 : index
    %c0_4 = arith.constant 0 : index
    %6 = vector.load %arg2[%c0_3, %c0_4] : memref<64x512xbf16, #tpu.memory_space<vmem>>, vector<64x512xbf16>
    %cst = arith.constant dense<0.000000e+00> : vector<32x512xf32>
    %7 = tpu.matmul %5, %6, %cst {dimension_numbers = #tpu.dot_dimension_numbers<[1], [0], [0], [1], [0, 0, 1, 1], [], []>} : vector<32x64xbf16>, vector<64x512xbf16>, vector<32x512xf32> -> vector<32x512xf32>
    %c0_5 = arith.constant 0 : index
    %c0_6 = arith.constant 0 : index
    %8 = vector.load %arg4[%c0_5, %c0_6] : memref<1x512xf32, #tpu.memory_space<vmem>>, vector<1x512xf32>
    %9 = vector.broadcast %8 : vector<1x512xf32> to vector<32x512xf32>
    %10 = arith.addf %7, %9 : vector<32x512xf32>
    %11 = vector.shape_cast %10 : vector<32x512xf32> to vector<4x8x512xf32>
    %c0_7 = arith.constant 0 : index
    %c0_8 = arith.constant 0 : index
    %12 = vector.load %arg3[%c0_7, %c0_8] : memref<128x512xbf16, #tpu.memory_space<vmem>>, vector<128x512xbf16>
    %c0_9 = arith.constant 0 : index
    %c0_10 = arith.constant 0 : index
    %13 = vector.load %arg11[%c0_9, %c0_10] : memref<8x128xf32, #tpu.memory_space<vmem>>, vector<8x128xf32>
    %c0_11 = arith.constant 0 : index
    %c0_12 = arith.constant 0 : index
    %14 = vector.load %arg12[%c0_11, %c0_12] : memref<8x128xf32, #tpu.memory_space<vmem>>, vector<8x128xf32>
    %15 = vector.extract_strided_slice %11 {offsets = [0, 0, 0], sizes = [1, 8, 512], strides = [1, 1, 1]} : vector<4x8x512xf32> to vector<1x8x512xf32>
    %16 = vector.shape_cast %15 : vector<1x8x512xf32> to vector<8x512xf32>
    %17 = arith.truncf %13 : vector<8x128xf32> to vector<8x128xbf16>
    %cst_13 = arith.constant dense<0.000000e+00> : vector<8x512xf32>
    %18 = tpu.matmul %17, %12, %cst_13 {dimension_numbers = #tpu.dot_dimension_numbers<[1], [0], [0], [1], [0, 0, 1, 1], [], []>} : vector<8x128xbf16>, vector<128x512xbf16>, vector<8x512xf32> -> vector<8x512xf32>
    %19 = arith.addf %16, %18 : vector<8x512xf32>
    %20 = vector.extract_strided_slice %19 {offsets = [0, 0], sizes = [8, 128], strides = [1, 1]} : vector<8x512xf32> to vector<8x128xf32>
    %21 = arith.negf %20 : vector<8x128xf32>
    %22 = math.exp %21 : vector<8x128xf32>
    %cst_14 = arith.constant 1.000000e+00 : f32
    %23 = vector.broadcast %cst_14 : f32 to vector<8x128xf32>
    %24 = arith.addf %23, %22 : vector<8x128xf32>
    %25 = arith.divf %23, %24 : vector<8x128xf32>
    %26 = vector.extract_strided_slice %19 {offsets = [0, 128], sizes = [8, 128], strides = [1, 1]} : vector<8x512xf32> to vector<8x128xf32>
    %27 = arith.negf %26 : vector<8x128xf32>
    %28 = math.exp %27 : vector<8x128xf32>
    %cst_15 = arith.constant 1.000000e+00 : f32
    %29 = vector.broadcast %cst_15 : f32 to vector<8x128xf32>
    %30 = arith.addf %29, %28 : vector<8x128xf32>
    %31 = arith.divf %29, %30 : vector<8x128xf32>
    %32 = vector.extract_strided_slice %19 {offsets = [0, 256], sizes = [8, 128], strides = [1, 1]} : vector<8x512xf32> to vector<8x128xf32>
    %33 = math.tanh %32 : vector<8x128xf32>
    %34 = vector.extract_strided_slice %19 {offsets = [0, 384], sizes = [8, 128], strides = [1, 1]} : vector<8x512xf32> to vector<8x128xf32>
    %35 = arith.negf %34 : vector<8x128xf32>
    %36 = math.exp %35 : vector<8x128xf32>
    %cst_16 = arith.constant 1.000000e+00 : f32
    %37 = vector.broadcast %cst_16 : f32 to vector<8x128xf32>
    %38 = arith.addf %37, %36 : vector<8x128xf32>
    %39 = arith.divf %37, %38 : vector<8x128xf32>
    %40 = arith.mulf %31, %14 : vector<8x128xf32>
    %41 = arith.mulf %25, %33 : vector<8x128xf32>
    %42 = arith.addf %40, %41 : vector<8x128xf32>
    %43 = math.tanh %42 : vector<8x128xf32>
    %44 = arith.mulf %39, %43 : vector<8x128xf32>
    %45 = vector.extract_strided_slice %11 {offsets = [1, 0, 0], sizes = [1, 8, 512], strides = [1, 1, 1]} : vector<4x8x512xf32> to vector<1x8x512xf32>
    %46 = vector.shape_cast %45 : vector<1x8x512xf32> to vector<8x512xf32>
    %47 = arith.truncf %44 : vector<8x128xf32> to vector<8x128xbf16>
    %cst_17 = arith.constant dense<0.000000e+00> : vector<8x512xf32>
    %48 = tpu.matmul %47, %12, %cst_17 {dimension_numbers = #tpu.dot_dimension_numbers<[1], [0], [0], [1], [0, 0, 1, 1], [], []>} : vector<8x128xbf16>, vector<128x512xbf16>, vector<8x512xf32> -> vector<8x512xf32>
    %49 = arith.addf %46, %48 : vector<8x512xf32>
    %50 = vector.extract_strided_slice %49 {offsets = [0, 0], sizes = [8, 128], strides = [1, 1]} : vector<8x512xf32> to vector<8x128xf32>
    %51 = arith.negf %50 : vector<8x128xf32>
    %52 = math.exp %51 : vector<8x128xf32>
    %cst_18 = arith.constant 1.000000e+00 : f32
    %53 = vector.broadcast %cst_18 : f32 to vector<8x128xf32>
    %54 = arith.addf %53, %52 : vector<8x128xf32>
    %55 = arith.divf %53, %54 : vector<8x128xf32>
    %56 = vector.extract_strided_slice %49 {offsets = [0, 128], sizes = [8, 128], strides = [1, 1]} : vector<8x512xf32> to vector<8x128xf32>
    %57 = arith.negf %56 : vector<8x128xf32>
    %58 = math.exp %57 : vector<8x128xf32>
    %cst_19 = arith.constant 1.000000e+00 : f32
    %59 = vector.broadcast %cst_19 : f32 to vector<8x128xf32>
    %60 = arith.addf %59, %58 : vector<8x128xf32>
    %61 = arith.divf %59, %60 : vector<8x128xf32>
    %62 = vector.extract_strided_slice %49 {offsets = [0, 256], sizes = [8, 128], strides = [1, 1]} : vector<8x512xf32> to vector<8x128xf32>
    %63 = math.tanh %62 : vector<8x128xf32>
    %64 = vector.extract_strided_slice %49 {offsets = [0, 384], sizes = [8, 128], strides = [1, 1]} : vector<8x512xf32> to vector<8x128xf32>
    %65 = arith.negf %64 : vector<8x128xf32>
    %66 = math.exp %65 : vector<8x128xf32>
    %cst_20 = arith.constant 1.000000e+00 : f32
    %67 = vector.broadcast %cst_20 : f32 to vector<8x128xf32>
    %68 = arith.addf %67, %66 : vector<8x128xf32>
    %69 = arith.divf %67, %68 : vector<8x128xf32>
    %70 = arith.mulf %61, %42 : vector<8x128xf32>
    %71 = arith.mulf %55, %63 : vector<8x128xf32>
    %72 = arith.addf %70, %71 : vector<8x128xf32>
    %73 = math.tanh %72 : vector<8x128xf32>
    %74 = arith.mulf %69, %73 : vector<8x128xf32>
    %75 = vector.extract_strided_slice %11 {offsets = [2, 0, 0], sizes = [1, 8, 512], strides = [1, 1, 1]} : vector<4x8x512xf32> to vector<1x8x512xf32>
    %76 = vector.shape_cast %75 : vector<1x8x512xf32> to vector<8x512xf32>
    %77 = arith.truncf %74 : vector<8x128xf32> to vector<8x128xbf16>
    %cst_21 = arith.constant dense<0.000000e+00> : vector<8x512xf32>
    %78 = tpu.matmul %77, %12, %cst_21 {dimension_numbers = #tpu.dot_dimension_numbers<[1], [0], [0], [1], [0, 0, 1, 1], [], []>} : vector<8x128xbf16>, vector<128x512xbf16>, vector<8x512xf32> -> vector<8x512xf32>
    %79 = arith.addf %76, %78 : vector<8x512xf32>
    %80 = vector.extract_strided_slice %79 {offsets = [0, 0], sizes = [8, 128], strides = [1, 1]} : vector<8x512xf32> to vector<8x128xf32>
    %81 = arith.negf %80 : vector<8x128xf32>
    %82 = math.exp %81 : vector<8x128xf32>
    %cst_22 = arith.constant 1.000000e+00 : f32
    %83 = vector.broadcast %cst_22 : f32 to vector<8x128xf32>
    %84 = arith.addf %83, %82 : vector<8x128xf32>
    %85 = arith.divf %83, %84 : vector<8x128xf32>
    %86 = vector.extract_strided_slice %79 {offsets = [0, 128], sizes = [8, 128], strides = [1, 1]} : vector<8x512xf32> to vector<8x128xf32>
    %87 = arith.negf %86 : vector<8x128xf32>
    %88 = math.exp %87 : vector<8x128xf32>
    %cst_23 = arith.constant 1.000000e+00 : f32
    %89 = vector.broadcast %cst_23 : f32 to vector<8x128xf32>
    %90 = arith.addf %89, %88 : vector<8x128xf32>
    %91 = arith.divf %89, %90 : vector<8x128xf32>
    %92 = vector.extract_strided_slice %79 {offsets = [0, 256], sizes = [8, 128], strides = [1, 1]} : vector<8x512xf32> to vector<8x128xf32>
    %93 = math.tanh %92 : vector<8x128xf32>
    %94 = vector.extract_strided_slice %79 {offsets = [0, 384], sizes = [8, 128], strides = [1, 1]} : vector<8x512xf32> to vector<8x128xf32>
    %95 = arith.negf %94 : vector<8x128xf32>
    %96 = math.exp %95 : vector<8x128xf32>
    %cst_24 = arith.constant 1.000000e+00 : f32
    %97 = vector.broadcast %cst_24 : f32 to vector<8x128xf32>
    %98 = arith.addf %97, %96 : vector<8x128xf32>
    %99 = arith.divf %97, %98 : vector<8x128xf32>
    %100 = arith.mulf %91, %72 : vector<8x128xf32>
    %101 = arith.mulf %85, %93 : vector<8x128xf32>
    %102 = arith.addf %100, %101 : vector<8x128xf32>
    %103 = math.tanh %102 : vector<8x128xf32>
    %104 = arith.mulf %99, %103 : vector<8x128xf32>
    %105 = vector.extract_strided_slice %11 {offsets = [3, 0, 0], sizes = [1, 8, 512], strides = [1, 1, 1]} : vector<4x8x512xf32> to vector<1x8x512xf32>
    %106 = vector.shape_cast %105 : vector<1x8x512xf32> to vector<8x512xf32>
    %107 = arith.truncf %104 : vector<8x128xf32> to vector<8x128xbf16>
    %cst_25 = arith.constant dense<0.000000e+00> : vector<8x512xf32>
    %108 = tpu.matmul %107, %12, %cst_25 {dimension_numbers = #tpu.dot_dimension_numbers<[1], [0], [0], [1], [0, 0, 1, 1], [], []>} : vector<8x128xbf16>, vector<128x512xbf16>, vector<8x512xf32> -> vector<8x512xf32>
    %109 = arith.addf %106, %108 : vector<8x512xf32>
    %110 = vector.extract_strided_slice %109 {offsets = [0, 0], sizes = [8, 128], strides = [1, 1]} : vector<8x512xf32> to vector<8x128xf32>
    %111 = arith.negf %110 : vector<8x128xf32>
    %112 = math.exp %111 : vector<8x128xf32>
    %cst_26 = arith.constant 1.000000e+00 : f32
    %113 = vector.broadcast %cst_26 : f32 to vector<8x128xf32>
    %114 = arith.addf %113, %112 : vector<8x128xf32>
    %115 = arith.divf %113, %114 : vector<8x128xf32>
    %116 = vector.extract_strided_slice %109 {offsets = [0, 128], sizes = [8, 128], strides = [1, 1]} : vector<8x512xf32> to vector<8x128xf32>
    %117 = arith.negf %116 : vector<8x128xf32>
    %118 = math.exp %117 : vector<8x128xf32>
    %cst_27 = arith.constant 1.000000e+00 : f32
    %119 = vector.broadcast %cst_27 : f32 to vector<8x128xf32>
    %120 = arith.addf %119, %118 : vector<8x128xf32>
    %121 = arith.divf %119, %120 : vector<8x128xf32>
    %122 = vector.extract_strided_slice %109 {offsets = [0, 256], sizes = [8, 128], strides = [1, 1]} : vector<8x512xf32> to vector<8x128xf32>
    %123 = math.tanh %122 : vector<8x128xf32>
    %124 = vector.extract_strided_slice %109 {offsets = [0, 384], sizes = [8, 128], strides = [1, 1]} : vector<8x512xf32> to vector<8x128xf32>
    %125 = arith.negf %124 : vector<8x128xf32>
    %126 = math.exp %125 : vector<8x128xf32>
    %cst_28 = arith.constant 1.000000e+00 : f32
    %127 = vector.broadcast %cst_28 : f32 to vector<8x128xf32>
    %128 = arith.addf %127, %126 : vector<8x128xf32>
    %129 = arith.divf %127, %128 : vector<8x128xf32>
    %130 = arith.mulf %121, %102 : vector<8x128xf32>
    %131 = arith.mulf %115, %123 : vector<8x128xf32>
    %132 = arith.addf %130, %131 : vector<8x128xf32>
    %133 = math.tanh %132 : vector<8x128xf32>
    %134 = arith.mulf %129, %133 : vector<8x128xf32>
    %c0_29 = arith.constant 0 : index
    %c0_30 = arith.constant 0 : index
    %135 = vector.load %arg11[%c0_29, %c0_30] : memref<8x128xf32, #tpu.memory_space<vmem>>, vector<8x128xf32>
    tpu.vector_store %arg11[%c0_29, %c0_30], %134 {strides = array<i32>} : memref<8x128xf32, #tpu.memory_space<vmem>>, vector<8x128xf32>,
    %c0_31 = arith.constant 0 : index
    %c0_32 = arith.constant 0 : index
    %136 = vector.load %arg12[%c0_31, %c0_32] : memref<8x128xf32, #tpu.memory_space<vmem>>, vector<8x128xf32>
    tpu.vector_store %arg12[%c0_31, %c0_32], %132 {strides = array<i32>} : memref<8x128xf32, #tpu.memory_space<vmem>>, vector<8x128xf32>,
    %137 = tpu.concatenate %44, %74, %104, %134 in 0 : vector<8x128xf32>, vector<8x128xf32>, vector<8x128xf32>, vector<8x128xf32> -> vector<32x128xf32>
    %138 = arith.truncf %137 : vector<32x128xf32> to vector<32x128xbf16>
    %c0_33 = arith.constant 0 : index
    %c0_34 = arith.constant 0 : index
    %139 = vector.load %arg5[%c0_33, %c0_34] : memref<128x512xbf16, #tpu.memory_space<vmem>>, vector<128x512xbf16>
    %cst_35 = arith.constant dense<0.000000e+00> : vector<32x512xf32>
    %140 = tpu.matmul %138, %139, %cst_35 {dimension_numbers = #tpu.dot_dimension_numbers<[1], [0], [0], [1], [0, 0, 1, 1], [], []>} : vector<32x128xbf16>, vector<128x512xbf16>, vector<32x512xf32> -> vector<32x512xf32>
    %c0_36 = arith.constant 0 : index
    %c0_37 = arith.constant 0 : index
    %141 = vector.load %arg7[%c0_36, %c0_37] : memref<1x512xf32, #tpu.memory_space<vmem>>, vector<1x512xf32>
    %142 = vector.broadcast %141 : vector<1x512xf32> to vector<32x512xf32>
    %143 = arith.addf %140, %142 : vector<32x512xf32>
    %144 = vector.shape_cast %143 : vector<32x512xf32> to vector<4x8x512xf32>
    %c0_38 = arith.constant 0 : index
    %c0_39 = arith.constant 0 : index
    %145 = vector.load %arg6[%c0_38, %c0_39] : memref<128x512xbf16, #tpu.memory_space<vmem>>, vector<128x512xbf16>
    %c0_40 = arith.constant 0 : index
    %c0_41 = arith.constant 0 : index
    %146 = vector.load %arg13[%c0_40, %c0_41] : memref<8x128xf32, #tpu.memory_space<vmem>>, vector<8x128xf32>
    %c0_42 = arith.constant 0 : index
    %c0_43 = arith.constant 0 : index
    %147 = vector.load %arg14[%c0_42, %c0_43] : memref<8x128xf32, #tpu.memory_space<vmem>>, vector<8x128xf32>
    %148 = vector.extract_strided_slice %144 {offsets = [0, 0, 0], sizes = [1, 8, 512], strides = [1, 1, 1]} : vector<4x8x512xf32> to vector<1x8x512xf32>
    %149 = vector.shape_cast %148 : vector<1x8x512xf32> to vector<8x512xf32>
    %150 = arith.truncf %146 : vector<8x128xf32> to vector<8x128xbf16>
    %cst_44 = arith.constant dense<0.000000e+00> : vector<8x512xf32>
    %151 = tpu.matmul %150, %145, %cst_44 {dimension_numbers = #tpu.dot_dimension_numbers<[1], [0], [0], [1], [0, 0, 1, 1], [], []>} : vector<8x128xbf16>, vector<128x512xbf16>, vector<8x512xf32> -> vector<8x512xf32>
    %152 = arith.addf %149, %151 : vector<8x512xf32>
    %153 = vector.extract_strided_slice %152 {offsets = [0, 0], sizes = [8, 128], strides = [1, 1]} : vector<8x512xf32> to vector<8x128xf32>
    %154 = arith.negf %153 : vector<8x128xf32>
    %155 = math.exp %154 : vector<8x128xf32>
    %cst_45 = arith.constant 1.000000e+00 : f32
    %156 = vector.broadcast %cst_45 : f32 to vector<8x128xf32>
    %157 = arith.addf %156, %155 : vector<8x128xf32>
    %158 = arith.divf %156, %157 : vector<8x128xf32>
    %159 = vector.extract_strided_slice %152 {offsets = [0, 128], sizes = [8, 128], strides = [1, 1]} : vector<8x512xf32> to vector<8x128xf32>
    %160 = arith.negf %159 : vector<8x128xf32>
    %161 = math.exp %160 : vector<8x128xf32>
    %cst_46 = arith.constant 1.000000e+00 : f32
    %162 = vector.broadcast %cst_46 : f32 to vector<8x128xf32>
    %163 = arith.addf %162, %161 : vector<8x128xf32>
    %164 = arith.divf %162, %163 : vector<8x128xf32>
    %165 = vector.extract_strided_slice %152 {offsets = [0, 256], sizes = [8, 128], strides = [1, 1]} : vector<8x512xf32> to vector<8x128xf32>
    %166 = math.tanh %165 : vector<8x128xf32>
    %167 = vector.extract_strided_slice %152 {offsets = [0, 384], sizes = [8, 128], strides = [1, 1]} : vector<8x512xf32> to vector<8x128xf32>
    %168 = arith.negf %167 : vector<8x128xf32>
    %169 = math.exp %168 : vector<8x128xf32>
    %cst_47 = arith.constant 1.000000e+00 : f32
    %170 = vector.broadcast %cst_47 : f32 to vector<8x128xf32>
    %171 = arith.addf %170, %169 : vector<8x128xf32>
    %172 = arith.divf %170, %171 : vector<8x128xf32>
    %173 = arith.mulf %164, %147 : vector<8x128xf32>
    %174 = arith.mulf %158, %166 : vector<8x128xf32>
    %175 = arith.addf %173, %174 : vector<8x128xf32>
    %176 = math.tanh %175 : vector<8x128xf32>
    %177 = arith.mulf %172, %176 : vector<8x128xf32>
    %178 = vector.extract_strided_slice %144 {offsets = [1, 0, 0], sizes = [1, 8, 512], strides = [1, 1, 1]} : vector<4x8x512xf32> to vector<1x8x512xf32>
    %179 = vector.shape_cast %178 : vector<1x8x512xf32> to vector<8x512xf32>
    %180 = arith.truncf %177 : vector<8x128xf32> to vector<8x128xbf16>
    %cst_48 = arith.constant dense<0.000000e+00> : vector<8x512xf32>
    %181 = tpu.matmul %180, %145, %cst_48 {dimension_numbers = #tpu.dot_dimension_numbers<[1], [0], [0], [1], [0, 0, 1, 1], [], []>} : vector<8x128xbf16>, vector<128x512xbf16>, vector<8x512xf32> -> vector<8x512xf32>
    %182 = arith.addf %179, %181 : vector<8x512xf32>
    %183 = vector.extract_strided_slice %182 {offsets = [0, 0], sizes = [8, 128], strides = [1, 1]} : vector<8x512xf32> to vector<8x128xf32>
    %184 = arith.negf %183 : vector<8x128xf32>
    %185 = math.exp %184 : vector<8x128xf32>
    %cst_49 = arith.constant 1.000000e+00 : f32
    %186 = vector.broadcast %cst_49 : f32 to vector<8x128xf32>
    %187 = arith.addf %186, %185 : vector<8x128xf32>
    %188 = arith.divf %186, %187 : vector<8x128xf32>
    %189 = vector.extract_strided_slice %182 {offsets = [0, 128], sizes = [8, 128], strides = [1, 1]} : vector<8x512xf32> to vector<8x128xf32>
    %190 = arith.negf %189 : vector<8x128xf32>
    %191 = math.exp %190 : vector<8x128xf32>
    %cst_50 = arith.constant 1.000000e+00 : f32
    %192 = vector.broadcast %cst_50 : f32 to vector<8x128xf32>
    %193 = arith.addf %192, %191 : vector<8x128xf32>
    %194 = arith.divf %192, %193 : vector<8x128xf32>
    %195 = vector.extract_strided_slice %182 {offsets = [0, 256], sizes = [8, 128], strides = [1, 1]} : vector<8x512xf32> to vector<8x128xf32>
    %196 = math.tanh %195 : vector<8x128xf32>
    %197 = vector.extract_strided_slice %182 {offsets = [0, 384], sizes = [8, 128], strides = [1, 1]} : vector<8x512xf32> to vector<8x128xf32>
    %198 = arith.negf %197 : vector<8x128xf32>
    %199 = math.exp %198 : vector<8x128xf32>
    %cst_51 = arith.constant 1.000000e+00 : f32
    %200 = vector.broadcast %cst_51 : f32 to vector<8x128xf32>
    %201 = arith.addf %200, %199 : vector<8x128xf32>
    %202 = arith.divf %200, %201 : vector<8x128xf32>
    %203 = arith.mulf %194, %175 : vector<8x128xf32>
    %204 = arith.mulf %188, %196 : vector<8x128xf32>
    %205 = arith.addf %203, %204 : vector<8x128xf32>
    %206 = math.tanh %205 : vector<8x128xf32>
    %207 = arith.mulf %202, %206 : vector<8x128xf32>
    %208 = vector.extract_strided_slice %144 {offsets = [2, 0, 0], sizes = [1, 8, 512], strides = [1, 1, 1]} : vector<4x8x512xf32> to vector<1x8x512xf32>
    %209 = vector.shape_cast %208 : vector<1x8x512xf32> to vector<8x512xf32>
    %210 = arith.truncf %207 : vector<8x128xf32> to vector<8x128xbf16>
    %cst_52 = arith.constant dense<0.000000e+00> : vector<8x512xf32>
    %211 = tpu.matmul %210, %145, %cst_52 {dimension_numbers = #tpu.dot_dimension_numbers<[1], [0], [0], [1], [0, 0, 1, 1], [], []>} : vector<8x128xbf16>, vector<128x512xbf16>, vector<8x512xf32> -> vector<8x512xf32>
    %212 = arith.addf %209, %211 : vector<8x512xf32>
    %213 = vector.extract_strided_slice %212 {offsets = [0, 0], sizes = [8, 128], strides = [1, 1]} : vector<8x512xf32> to vector<8x128xf32>
    %214 = arith.negf %213 : vector<8x128xf32>
    %215 = math.exp %214 : vector<8x128xf32>
    %cst_53 = arith.constant 1.000000e+00 : f32
    %216 = vector.broadcast %cst_53 : f32 to vector<8x128xf32>
    %217 = arith.addf %216, %215 : vector<8x128xf32>
    %218 = arith.divf %216, %217 : vector<8x128xf32>
    %219 = vector.extract_strided_slice %212 {offsets = [0, 128], sizes = [8, 128], strides = [1, 1]} : vector<8x512xf32> to vector<8x128xf32>
    %220 = arith.negf %219 : vector<8x128xf32>
    %221 = math.exp %220 : vector<8x128xf32>
    %cst_54 = arith.constant 1.000000e+00 : f32
    %222 = vector.broadcast %cst_54 : f32 to vector<8x128xf32>
    %223 = arith.addf %222, %221 : vector<8x128xf32>
    %224 = arith.divf %222, %223 : vector<8x128xf32>
    %225 = vector.extract_strided_slice %212 {offsets = [0, 256], sizes = [8, 128], strides = [1, 1]} : vector<8x512xf32> to vector<8x128xf32>
    %226 = math.tanh %225 : vector<8x128xf32>
    %227 = vector.extract_strided_slice %212 {offsets = [0, 384], sizes = [8, 128], strides = [1, 1]} : vector<8x512xf32> to vector<8x128xf32>
    %228 = arith.negf %227 : vector<8x128xf32>
    %229 = math.exp %228 : vector<8x128xf32>
    %cst_55 = arith.constant 1.000000e+00 : f32
    %230 = vector.broadcast %cst_55 : f32 to vector<8x128xf32>
    %231 = arith.addf %230, %229 : vector<8x128xf32>
    %232 = arith.divf %230, %231 : vector<8x128xf32>
    %233 = arith.mulf %224, %205 : vector<8x128xf32>
    %234 = arith.mulf %218, %226 : vector<8x128xf32>
    %235 = arith.addf %233, %234 : vector<8x128xf32>
    %236 = math.tanh %235 : vector<8x128xf32>
    %237 = arith.mulf %232, %236 : vector<8x128xf32>
    %238 = vector.extract_strided_slice %144 {offsets = [3, 0, 0], sizes = [1, 8, 512], strides = [1, 1, 1]} : vector<4x8x512xf32> to vector<1x8x512xf32>
    %239 = vector.shape_cast %238 : vector<1x8x512xf32> to vector<8x512xf32>
    %240 = arith.truncf %237 : vector<8x128xf32> to vector<8x128xbf16>
    %cst_56 = arith.constant dense<0.000000e+00> : vector<8x512xf32>
    %241 = tpu.matmul %240, %145, %cst_56 {dimension_numbers = #tpu.dot_dimension_numbers<[1], [0], [0], [1], [0, 0, 1, 1], [], []>} : vector<8x128xbf16>, vector<128x512xbf16>, vector<8x512xf32> -> vector<8x512xf32>
    %242 = arith.addf %239, %241 : vector<8x512xf32>
    %243 = vector.extract_strided_slice %242 {offsets = [0, 0], sizes = [8, 128], strides = [1, 1]} : vector<8x512xf32> to vector<8x128xf32>
    %244 = arith.negf %243 : vector<8x128xf32>
    %245 = math.exp %244 : vector<8x128xf32>
    %cst_57 = arith.constant 1.000000e+00 : f32
    %246 = vector.broadcast %cst_57 : f32 to vector<8x128xf32>
    %247 = arith.addf %246, %245 : vector<8x128xf32>
    %248 = arith.divf %246, %247 : vector<8x128xf32>
    %249 = vector.extract_strided_slice %242 {offsets = [0, 128], sizes = [8, 128], strides = [1, 1]} : vector<8x512xf32> to vector<8x128xf32>
    %250 = arith.negf %249 : vector<8x128xf32>
    %251 = math.exp %250 : vector<8x128xf32>
    %cst_58 = arith.constant 1.000000e+00 : f32
    %252 = vector.broadcast %cst_58 : f32 to vector<8x128xf32>
    %253 = arith.addf %252, %251 : vector<8x128xf32>
    %254 = arith.divf %252, %253 : vector<8x128xf32>
    %255 = vector.extract_strided_slice %242 {offsets = [0, 256], sizes = [8, 128], strides = [1, 1]} : vector<8x512xf32> to vector<8x128xf32>
    %256 = math.tanh %255 : vector<8x128xf32>
    %257 = vector.extract_strided_slice %242 {offsets = [0, 384], sizes = [8, 128], strides = [1, 1]} : vector<8x512xf32> to vector<8x128xf32>
    %258 = arith.negf %257 : vector<8x128xf32>
    %259 = math.exp %258 : vector<8x128xf32>
    %cst_59 = arith.constant 1.000000e+00 : f32
    %260 = vector.broadcast %cst_59 : f32 to vector<8x128xf32>
    %261 = arith.addf %260, %259 : vector<8x128xf32>
    %262 = arith.divf %260, %261 : vector<8x128xf32>
    %263 = arith.mulf %254, %235 : vector<8x128xf32>
    %264 = arith.mulf %248, %256 : vector<8x128xf32>
    %265 = arith.addf %263, %264 : vector<8x128xf32>
    %266 = math.tanh %265 : vector<8x128xf32>
    %267 = arith.mulf %262, %266 : vector<8x128xf32>
    %c0_60 = arith.constant 0 : index
    %c0_61 = arith.constant 0 : index
    %268 = vector.load %arg13[%c0_60, %c0_61] : memref<8x128xf32, #tpu.memory_space<vmem>>, vector<8x128xf32>
    tpu.vector_store %arg13[%c0_60, %c0_61], %267 {strides = array<i32>} : memref<8x128xf32, #tpu.memory_space<vmem>>, vector<8x128xf32>,
    %c0_62 = arith.constant 0 : index
    %c0_63 = arith.constant 0 : index
    %269 = vector.load %arg14[%c0_62, %c0_63] : memref<8x128xf32, #tpu.memory_space<vmem>>, vector<8x128xf32>
    tpu.vector_store %arg14[%c0_62, %c0_63], %265 {strides = array<i32>} : memref<8x128xf32, #tpu.memory_space<vmem>>, vector<8x128xf32>,
    %270 = tpu.concatenate %177, %207, %237, %267 in 0 : vector<8x128xf32>, vector<8x128xf32>, vector<8x128xf32>, vector<8x128xf32> -> vector<32x128xf32>
    %271 = arith.truncf %270 : vector<32x128xf32> to vector<32x128xbf16>
    %c0_64 = arith.constant 0 : index
    %c0_65 = arith.constant 0 : index
    %272 = vector.load %arg8[%c0_64, %c0_65] : memref<128x128xbf16, #tpu.memory_space<vmem>>, vector<128x128xbf16>
    %cst_66 = arith.constant dense<0.000000e+00> : vector<32x128xf32>
    %273 = tpu.matmul %271, %272, %cst_66 {dimension_numbers = #tpu.dot_dimension_numbers<[1], [0], [0], [1], [0, 0, 1, 1], [], []>} : vector<32x128xbf16>, vector<128x128xbf16>, vector<32x128xf32> -> vector<32x128xf32>
    %c0_67 = arith.constant 0 : index
    %c0_68 = arith.constant 0 : index
    %274 = vector.load %arg9[%c0_67, %c0_68] : memref<1x128xf32, #tpu.memory_space<vmem>>, vector<1x128xf32>
    %275 = vector.broadcast %274 : vector<1x128xf32> to vector<32x128xf32>
    %276 = arith.addf %273, %275 : vector<32x128xf32>
    %277 = vector.shape_cast %276 : vector<32x128xf32> to vector<4x8x128xf32>
    %c0_69 = arith.constant 0 : index
    %c0_70 = arith.constant 0 : index
    %c0_71 = arith.constant 0 : index
    %278 = vector.load %arg10[%c0_69, %c0_70, %c0_71] : memref<4x8x128xf32, #tpu.memory_space<vmem>>, vector<4x8x128xf32>
    tpu.vector_store %arg10[%c0_69, %c0_70, %c0_71], %277 {strides = array<i32>} : memref<4x8x128xf32, #tpu.memory_space<vmem>>, vector<4x8x128xf32>,
    return
  }
  func.func @transform_0(%arg0: i32) -> (i32, i32, i32) {
    %c0_i32 = arith.constant 0 : i32
    %c0_i32_0 = arith.constant 0 : i32
    %c0_i32_1 = arith.constant 0 : i32
    return %arg0, %c0_i32, %c0_i32_0 : i32, i32, i32
  }
  func.func @transform_1(%arg0: i32) -> (i32, i32) {
    %c0_i32 = arith.constant 0 : i32
    %c0_i32_0 = arith.constant 0 : i32
    %c0_i32_1 = arith.constant 0 : i32
    return %c0_i32, %c0_i32_0 : i32, i32
  }
  func.func @transform_2(%arg0: i32) -> (i32, i32) {
    %c0_i32 = arith.constant 0 : i32
    %c0_i32_0 = arith.constant 0 : i32
    %c0_i32_1 = arith.constant 0 : i32
    return %c0_i32, %c0_i32_0 : i32, i32
  }
  func.func @transform_3(%arg0: i32) -> (i32, i32) {
    %c0_i32 = arith.constant 0 : i32
    %c0_i32_0 = arith.constant 0 : i32
    %c0_i32_1 = arith.constant 0 : i32
    return %c0_i32, %c0_i32_0 : i32, i32
  }
  func.func @transform_4(%arg0: i32) -> (i32, i32) {
    %c0_i32 = arith.constant 0 : i32
    %c0_i32_0 = arith.constant 0 : i32
    %c0_i32_1 = arith.constant 0 : i32
    return %c0_i32, %c0_i32_0 : i32, i32
  }
  func.func @transform_5(%arg0: i32) -> (i32, i32) {
    %c0_i32 = arith.constant 0 : i32
    %c0_i32_0 = arith.constant 0 : i32
    %c0_i32_1 = arith.constant 0 : i32
    return %c0_i32, %c0_i32_0 : i32, i32
  }
  func.func @transform_6(%arg0: i32) -> (i32, i32) {
    %c0_i32 = arith.constant 0 : i32
    %c0_i32_0 = arith.constant 0 : i32
    %c0_i32_1 = arith.constant 0 : i32
    return %c0_i32, %c0_i32_0 : i32, i32
  }
  func.func @transform_7(%arg0: i32) -> (i32, i32) {
    %c0_i32 = arith.constant 0 : i32
    %c0_i32_0 = arith.constant 0 : i32
    %c0_i32_1 = arith.constant 0 : i32
    return %c0_i32, %c0_i32_0 : i32, i32
  }
  func.func @transform_8(%arg0: i32) -> (i32, i32) {
    %c0_i32 = arith.constant 0 : i32
    %c0_i32_0 = arith.constant 0 : i32
    %c0_i32_1 = arith.constant 0 : i32
    return %c0_i32, %c0_i32_0 : i32, i32
  }
  func.func @transform_9(%arg0: i32) -> (i32, i32, i32) {
    %c0_i32 = arith.constant 0 : i32
    %c0_i32_0 = arith.constant 0 : i32
    %c0_i32_1 = arith.constant 0 : i32
    return %arg0, %c0_i32, %c0_i32_0 : i32, i32, i32
  }
}

</mosaic_0001>

<llo_original>
// kernel: autocomplete_forward.1
$region0: #{autocomplete_forward.1}
  #allocation0 [shape = 'u32[]', space=smem, size = 0x4, offset = 0x4, fixed_abs, tag = 'smem constant byte address 0x4 - core index']
  #allocation1 [shape = 'u32[72,128]{1,0:T(1,128)}', space=vmem, size = 0x9000, scoped, tag = 'internal scratch']
  #allocation2 [shape = 'f32[8,128]{1,0:T(8,128)}', space=vmem, size = 0x1000, scoped, tag = 'scratch operand']
  #allocation3 [shape = 'f32[8,128]{1,0:T(8,128)}', space=vmem, size = 0x1000, scoped, tag = 'scratch operand']
  #allocation4 [shape = 'f32[8,128]{1,0:T(8,128)}', space=vmem, size = 0x1000, scoped, tag = 'scratch operand']
  #allocation5 [shape = 'f32[8,128]{1,0:T(8,128)}', space=vmem, size = 0x1000, scoped, tag = 'scratch operand']
  %s0 = inlined_call_operand.vmem [shape: f32[8,8,64], index: 0, kind: input, shape index: {}]
  %s1 = inlined_call_operand.vmem [shape: bf16[64,512], index: 1, kind: input, shape index: {}]
  %s2 = inlined_call_operand.vmem [shape: bf16[128,512], index: 2, kind: input, shape index: {}]
  %s3 = inlined_call_operand.vmem [shape: f32[1,512], index: 3, kind: input, shape index: {}]
  %s4 = inlined_call_operand.hbm [shape: bf16[128,512], index: 4, kind: input, shape index: {}]
  %s5 = inlined_call_operand.hbm [shape: bf16[128,512], index: 5, kind: input, shape index: {}]
  %s6 = inlined_call_operand.vmem [shape: f32[1,512], index: 6, kind: input, shape index: {}]
  %s7 = inlined_call_operand.vmem [shape: bf16[128,128], index: 7, kind: input, shape index: {}]
  %s8 = inlined_call_operand.vmem [shape: f32[1,128], index: 8, kind: input, shape index: {}]
  %s9 = inlined_call_operand.vmem [shape: f32[8,8,128], index: 9, kind: output, shape index: {}]
  %s10 = sld [smem:[#allocation0]]
  $region81: #{autocomplete_forward.1} parent=0
    _
  %s12 = ssub.s32 1, %s10
  %s13 = scalar_select 0, %s12, %s10
  $region1: #{autocomplete_forward.1} parent=0
    #allocation6 [shape = 'u8[131072]{0}', space=vmem, size = 0x20000, scoped, tag = 'input window, operand 4, single buffered']
    #allocation7 [shape = 's32[2]{0}', space=sflag, size = 0x8, scoped, tag = 'scoped memory for autocomplete_forward.1']
    #allocation8 [shape = 'u8[131072]{0}', space=vmem, size = 0x20000, scoped, tag = 'input window, operand 5, single buffered']
    #allocation9 [shape = 's32[1]{0}', space=sflag, size = 0x4, scoped, tag = 'scoped memory for autocomplete_forward.1']
    %14 = vsyncpa [#allocation7], 0
    %15 = vsyncpa [#allocation9], 0
    loop: start=0, step=1, limit=4
    $region2: #{autocomplete_forward.1} parent=1 // loop_pre_header
      _
    $region3: #{autocomplete_forward.1} parent=1 // loop_header
      %s17 = sphi 0, %s21
      %p18 = scmp.ge.s32.totalorder %s17, 4
      %s27 = sphi 0, %s29
      %s30 = sphi 0, %s27
      %s31 = sphi 0, %s30
      %s47 = sphi 0, %s31
      %s51 = sphi 0, %s51
      %s53 = sphi 0, %s51
      %s54 = sphi 0, %s53
      %s68 = sphi 0, %s54
      %s72 = sphi 0, %s72
      %s74 = sphi 0, %s72
      %s75 = sphi 0, %s74
      %s89 = sphi 0, %s75
      %s93 = sphi 0, %s93
      %s95 = sphi 0, %s93
      %s96 = sphi 0, %s95
      %s110 = sphi 0, %s96
      %s114 = sphi 0, %s114
      %s116 = sphi 0, %s114
      %s117 = sphi 0, %s116
      %s131 = sphi 0, %s117
      %s135 = sphi 0, %s135
      %s137 = sphi 0, %s135
      %s138 = sphi 0, %s137
      %s152 = sphi 0, %s138
      %s156 = sphi 0, %s156
      %s158 = sphi 0, %s156
      %s159 = sphi 0, %s158
      %s173 = sphi 0, %s159
      %s177 = sphi 0, %s177
      %s179 = sphi 0, %s177
      %s180 = sphi 0, %s179
      %s194 = sphi 0, %s180
      %s198 = sphi 0, %s198
      %s200 = sphi 0, %s198
      %s201 = sphi 0, %s200
      %s215 = sphi 0, %s201
      %s221 = sphi 0, %s223
      %s224 = sphi 0, %s221
      %s225 = sphi 0, %s224
      %s241 = sphi 0, %s225
    $region4: #{autocomplete_forward.1} parent=1 // loop_header_branch
      %20 = sbr.rel (%p18) target = $region8
    $region5: #{autocomplete_forward.1} parent=1 // loop_body
      %s22 = ssub.s32 %s17, 1
      %s23 = ssub.s32 %s17, 2
      %s24 = sadd.s32 %s17, 1
      %s25 = ssub.s32 %s17, %s24
      %p26 = scmp.eq.s32.totalorder %s25, 0
      %s28 = sadd.s32 %s27, 1
      %s29 = scalar_select %p26, %s27, %s28
      %p32 = pneg %p26
      %p33 = scmp.eq.s32.totalorder %s17, 1
      %p34 = por %p32, %p33
      %p35 = scmp.ne.s32.totalorder %s27, %s30
      %p36 = scmp.eq.s32.totalorder %s17, 0
      %p37 = por %p35, %p36
      %p38 = scmp.ne.s32.totalorder %s27, %s30
      %p39 = scmp.eq.s32.totalorder %s22, 1
      %p40 = por %p38, %p39
      %p41 = scmp.ne.s32.totalorder %s30, %s31
      %p42 = scmp.eq.s32.totalorder %s22, 0
      %p43 = por %p41, %p42
      %p44 = scmp.ne.s32.totalorder %s30, %s31
      %p45 = scmp.eq.s32.totalorder %s23, 1
      %p46 = por %p44, %p45
      %p48 = scmp.ne.s32.totalorder %s31, %s47
      %p49 = scmp.eq.s32.totalorder %s23, 0
      %p50 = por %p48, %p49
      %s52 = sadd.s32 %s51, 1
      %p55 = scmp.eq.s32.totalorder %s17, 1
      %p56 = scmp.ne.s32.totalorder %s51, %s53
      %p57 = scmp.eq.s32.totalorder %s17, 0
      %p58 = por %p56, %p57
      %p59 = scmp.ne.s32.totalorder %s51, %s53
      %p60 = scmp.eq.s32.totalorder %s22, 1
      %p61 = por %p59, %p60
      %p62 = scmp.ne.s32.totalorder %s53, %s54
      %p63 = scmp.eq.s32.totalorder %s22, 0
      %p64 = por %p62, %p63
      %p65 = scmp.ne.s32.totalorder %s53, %s54
      %p66 = scmp.eq.s32.totalorder %s23, 1
      %p67 = por %p65, %p66
      %p69 = scmp.ne.s32.totalorder %s54, %s68
      %p70 = scmp.eq.s32.totalorder %s23, 0
      %p71 = por %p69, %p70
      %s73 = sadd.s32 %s72, 1
      %p76 = scmp.eq.s32.totalorder %s17, 1
      %p77 = scmp.ne.s32.totalorder %s72, %s74
      %p78 = scmp.eq.s32.totalorder %s17, 0
      %p79 = por %p77, %p78
      %p80 = scmp.ne.s32.totalorder %s72, %s74
      %p81 = scmp.eq.s32.totalorder %s22, 1
      %p82 = por %p80, %p81
      %p83 = scmp.ne.s32.totalorder %s74, %s75
      %p84 = scmp.eq.s32.totalorder %s22, 0
      %p85 = por %p83, %p84
      %p86 = scmp.ne.s32.totalorder %s74, %s75
      %p87 = scmp.eq.s32.totalorder %s23, 1
      %p88 = por %p86, %p87
      %p90 = scmp.ne.s32.totalorder %s75, %s89
      %p91 = scmp.eq.s32.totalorder %s23, 0
      %p92 = por %p90, %p91
      %s94 = sadd.s32 %s93, 1
      %p97 = scmp.eq.s32.totalorder %s17, 1
      %p98 = scmp.ne.s32.totalorder %s93, %s95
      %p99 = scmp.eq.s32.totalorder %s17, 0
      %p100 = por %p98, %p99
      %p101 = scmp.ne.s32.totalorder %s93, %s95
      %p102 = scmp.eq.s32.totalorder %s22, 1
      %p103 = por %p101, %p102
      %p104 = scmp.ne.s32.totalorder %s95, %s96
      %p105 = scmp.eq.s32.totalorder %s22, 0
      %p106 = por %p104, %p105
      %p107 = scmp.ne.s32.totalorder %s95, %s96
      %p108 = scmp.eq.s32.totalorder %s23, 1
      %p109 = por %p107, %p108
      %p111 = scmp.ne.s32.totalorder %s96, %s110
      %p112 = scmp.eq.s32.totalorder %s23, 0
      %p113 = por %p111, %p112
      %s115 = sadd.s32 %s114, 1
      %p118 = scmp.eq.s32.totalorder %s17, 1
      %p119 = scmp.ne.s32.totalorder %s114, %s116
      %p120 = scmp.eq.s32.totalorder %s17, 0
      %p121 = por %p119, %p120
      %p122 = scmp.ne.s32.totalorder %s114, %s116
      %p123 = scmp.eq.s32.totalorder %s22, 1
      %p124 = por %p122, %p123
      %p125 = scmp.ne.s32.totalorder %s116, %s117
      %p126 = scmp.eq.s32.totalorder %s22, 0
      %p127 = por %p125, %p126
      %p128 = scmp.ne.s32.totalorder %s116, %s117
      %p129 = scmp.eq.s32.totalorder %s23, 1
      %p130 = por %p128, %p129
      %p132 = scmp.ne.s32.totalorder %s117, %s131
      %p133 = scmp.eq.s32.totalorder %s23, 0
      %p134 = por %p132, %p133
      %s136 = sadd.s32 %s135, 1
      %p139 = scmp.eq.s32.totalorder %s17, 1
      %p140 = scmp.ne.s32.totalorder %s135, %s137
      %p141 = scmp.eq.s32.totalorder %s17, 0
      %p142 = por %p140, %p141
      %p143 = scmp.ne.s32.totalorder %s135, %s137
      %p144 = scmp.eq.s32.totalorder %s22, 1
      %p145 = por %p143, %p144
      %p146 = scmp.ne.s32.totalorder %s137, %s138
      %p147 = scmp.eq.s32.totalorder %s22, 0
      %p148 = por %p146, %p147
      %p149 = scmp.ne.s32.totalorder %s137, %s138
      %p150 = scmp.eq.s32.totalorder %s23, 1
      %p151 = por %p149, %p150
      %p153 = scmp.ne.s32.totalorder %s138, %s152
      %p154 = scmp.eq.s32.totalorder %s23, 0
      %p155 = por %p153, %p154
      %s157 = sadd.s32 %s156, 1
      %p160 = scmp.eq.s32.totalorder %s17, 1
      %p161 = scmp.ne.s32.totalorder %s156, %s158
      %p162 = scmp.eq.s32.totalorder %s17, 0
      %p163 = por %p161, %p162
      %p164 = scmp.ne.s32.totalorder %s156, %s158
      %p165 = scmp.eq.s32.totalorder %s22, 1
      %p166 = por %p164, %p165
      %p167 = scmp.ne.s32.totalorder %s158, %s159
      %p168 = scmp.eq.s32.totalorder %s22, 0
      %p169 = por %p167, %p168
      %p170 = scmp.ne.s32.totalorder %s158, %s159
      %p171 = scmp.eq.s32.totalorder %s23, 1
      %p172 = por %p170, %p171
      %p174 = scmp.ne.s32.totalorder %s159, %s173
      %p175 = scmp.eq.s32.totalorder %s23, 0
      %p176 = por %p174, %p175
      %s178 = sadd.s32 %s177, 1
      %p181 = scmp.eq.s32.totalorder %s17, 1
      %p182 = scmp.ne.s32.totalorder %s177, %s179
      %p183 = scmp.eq.s32.totalorder %s17, 0
      %p184 = por %p182, %p183
      %p185 = scmp.ne.s32.totalorder %s177, %s179
      %p186 = scmp.eq.s32.totalorder %s22, 1
      %p187 = por %p185, %p186
      %p188 = scmp.ne.s32.totalorder %s179, %s180
      %p189 = scmp.eq.s32.totalorder %s22, 0
      %p190 = por %p188, %p189
      %p191 = scmp.ne.s32.totalorder %s179, %s180
      %p192 = scmp.eq.s32.totalorder %s23, 1
      %p193 = por %p191, %p192
      %p195 = scmp.ne.s32.totalorder %s180, %s194
      %p196 = scmp.eq.s32.totalorder %s23, 0
      %p197 = por %p195, %p196
      %s199 = sadd.s32 %s198, 1
      %p202 = scmp.eq.s32.totalorder %s17, 1
      %p203 = scmp.ne.s32.totalorder %s198, %s200
      %p204 = scmp.eq.s32.totalorder %s17, 0
      %p205 = por %p203, %p204
      %p206 = scmp.ne.s32.totalorder %s198, %s200
      %p207 = scmp.eq.s32.totalorder %s22, 1
      %p208 = por %p206, %p207
      %p209 = scmp.ne.s32.totalorder %s200, %s201
      %p210 = scmp.eq.s32.totalorder %s22, 0
      %p211 = por %p209, %p210
      %p212 = scmp.ne.s32.totalorder %s200, %s201
      %p213 = scmp.eq.s32.totalorder %s23, 1
      %p214 = por %p212, %p213
      %p216 = scmp.ne.s32.totalorder %s201, %s215
      %p217 = scmp.eq.s32.totalorder %s23, 0
      %p218 = por %p216, %p217
      %s219 = ssub.s32 %s17, %s24
      %p220 = scmp.eq.s32.totalorder %s219, 0
      %s222 = sadd.s32 %s221, 1
      %s223 = scalar_select %p220, %s221, %s222
      %p226 = pneg %p220
      %p227 = scmp.eq.s32.totalorder %s17, 1
      %p228 = por %p226, %p227
      %p229 = scmp.ne.s32.totalorder %s221, %s224
      %p230 = scmp.eq.s32.totalorder %s17, 0
      %p231 = por %p229, %p230
      %p232 = scmp.ne.s32.totalorder %s221, %s224
      %p233 = scmp.eq.s32.totalorder %s22, 1
      %p234 = por %p232, %p233
      %p235 = scmp.ne.s32.totalorder %s224, %s225
      %p236 = scmp.eq.s32.totalorder %s22, 0
      %p237 = por %p235, %p236
      %p238 = scmp.ne.s32.totalorder %s224, %s225
      %p239 = scmp.eq.s32.totalorder %s23, 1
      %p240 = por %p238, %p239
      %p242 = scmp.ne.s32.totalorder %s225, %s241
      %p243 = scmp.eq.s32.totalorder %s23, 0
      %p244 = por %p242, %p243
      %p245 = scmp.le.s32.totalorder 1, %s17
      %p246 = scmp.lt.s32.totalorder %s17, 3
      %p247 = pnand %p245, %p246
      %p248 = pneg %p247
      // Predicated region
      $region9: #{autocomplete_forward.1} parent=5 // pred_check
        _
      $region10: #{autocomplete_forward.1} parent=5 // pred_check_branch
        %250 = sbr.rel (%p247) target = $region12
      $region11: #{autocomplete_forward.1} parent=5 // pred_region
        %s251 = ssub.s32 %s17, 1
        // Predicated region
        $region13: #{autocomplete_forward.1} parent=11 // pred_check
          %p252 = pneg %p64
        $region14: #{autocomplete_forward.1} parent=11 // pred_check_branch
          %254 = sbr.rel (%p252) target = $region16
        $region15: #{autocomplete_forward.1} parent=11 // pred_region
          _
        $region16: #{autocomplete_forward.1} parent=11 // pred_fallthru
          _
        // Predicated region
        $region17: #{autocomplete_forward.1} parent=11 // pred_check
          %p255 = pneg %p85
        $region18: #{autocomplete_forward.1} parent=11 // pred_check_branch
          %257 = sbr.rel (%p255) target = $region20
        $region19: #{autocomplete_forward.1} parent=11 // pred_region
          _
        $region20: #{autocomplete_forward.1} parent=11 // pred_fallthru
          _
        // Predicated region
        $region21: #{autocomplete_forward.1} parent=11 // pred_check
          %p258 = pneg %p106
        $region22: #{autocomplete_forward.1} parent=11 // pred_check_branch
          %260 = sbr.rel (%p258) target = $region24
        $region23: #{autocomplete_forward.1} parent=11 // pred_region
          _
        $region24: #{autocomplete_forward.1} parent=11 // pred_fallthru
          _
        // Predicated region
        $region25: #{autocomplete_forward.1} parent=11 // pred_check
          %p261 = pneg %p127
        $region26: #{autocomplete_forward.1} parent=11 // pred_check_branch
          %263 = sbr.rel (%p261) target = $region28
        $region27: #{autocomplete_forward.1} parent=11 // pred_region
          %265 = vsyncadd [#allocation7], 0
          %s266 = sshll.u32 %s4, 4
          %s267 = int_to_ptr.hbm [resolvable:$true] %s266
          %s268 = sshll.u32 [#allocation6], 4
          %s269 = int_to_ptr.vmem [resolvable:$true] %s268
          %274 = dma.hbm_to_vmem [thread:$0]  %s267, 4096, %s269, [#allocation7], 256, 256, 16
        $region28: #{autocomplete_forward.1} parent=11 // pred_fallthru
          _
        // Predicated region
        $region29: #{autocomplete_forward.1} parent=11 // pred_check
          %p275 = pneg %p148
        $region30: #{autocomplete_forward.1} parent=11 // pred_check_branch
          %277 = sbr.rel (%p275) target = $region32
        $region31: #{autocomplete_forward.1} parent=11 // pred_region
          %279 = vsyncadd [#allocation9], 0
          %s280 = sshll.u32 %s5, 4
          %s281 = int_to_ptr.hbm [resolvable:$true] %s280
          %s282 = sshll.u32 [#allocation8], 4
          %s283 = int_to_ptr.vmem [resolvable:$true] %s282
          %288 = dma.hbm_to_vmem [thread:$0]  %s281, 4096, %s283, [#allocation9], 256, 256, 16
        $region32: #{autocomplete_forward.1} parent=11 // pred_fallthru
          _
        // Predicated region
        $region33: #{autocomplete_forward.1} parent=11 // pred_check
          %p289 = pneg %p169
        $region34: #{autocomplete_forward.1} parent=11 // pred_check_branch
          %291 = sbr.rel (%p289) target = $region36
        $region35: #{autocomplete_forward.1} parent=11 // pred_region
          _
        $region36: #{autocomplete_forward.1} parent=11 // pred_fallthru
          _
        // Predicated region
        $region37: #{autocomplete_forward.1} parent=11 // pred_check
          %p292 = pneg %p190
        $region38: #{autocomplete_forward.1} parent=11 // pred_check_branch
          %294 = sbr.rel (%p292) target = $region40
        $region39: #{autocomplete_forward.1} parent=11 // pred_region
          _
        $region40: #{autocomplete_forward.1} parent=11 // pred_fallthru
          _
        // Predicated region
        $region41: #{autocomplete_forward.1} parent=11 // pred_check
          %p295 = pneg %p211
        $region42: #{autocomplete_forward.1} parent=11 // pred_check_branch
          %297 = sbr.rel (%p295) target = $region44
        $region43: #{autocomplete_forward.1} parent=11 // pred_region
          _
        $region44: #{autocomplete_forward.1} parent=11 // pred_fallthru
          _
      $region12: #{autocomplete_forward.1} parent=5 // pred_fallthru
        _
      %p298 = scmp.lt.s32.totalorder %s17, 2
      // Predicated region
      $region45: #{autocomplete_forward.1} parent=5 // pred_check
        %p299 = pneg %p298
      $region46: #{autocomplete_forward.1} parent=5 // pred_check_branch
        %301 = sbr.rel (%p299) target = $region48
      $region47: #{autocomplete_forward.1} parent=5 // pred_region
        // Predicated region
        $region49: #{autocomplete_forward.1} parent=47 // pred_check
          %p302 = pneg %p37
        $region50: #{autocomplete_forward.1} parent=47 // pred_check_branch
          %304 = sbr.rel (%p302) target = $region52
        $region51: #{autocomplete_forward.1} parent=47 // pred_region
          %s305 = smul.u32 4, %s17
          %p306 = scmp.lt.s32.totalorder %s305, 7
          %s307 = scalar_select %p306, %s305, 7
          %s308 = smul.addr %s307, 8
          %s309 = scalar_lea.vmem %s0, %s308
          %s310 = smul.u32 4, %s17
        $region52: #{autocomplete_forward.1} parent=47 // pred_fallthru
          _
      $region48: #{autocomplete_forward.1} parent=5 // pred_fallthru
        _
      %p311 = scmp.le.s32.totalorder 1, %s17
      %p312 = scmp.lt.s32.totalorder %s17, 3
      %p313 = pnand %p311, %p312
      %p314 = pneg %p313
      // Predicated region
      $region53: #{autocomplete_forward.1} parent=5 // pred_check
        _
      $region54: #{autocomplete_forward.1} parent=5 // pred_check_branch
        %316 = sbr.rel (%p313) target = $region56
      $region55: #{autocomplete_forward.1} parent=5 // pred_region
        %s317 = ssub.s32 %s17, 1
        // Predicated region
        $region57: #{autocomplete_forward.1} parent=55 // pred_check
          %p318 = pneg %p127
        $region58: #{autocomplete_forward.1} parent=55 // pred_check_branch
          %320 = sbr.rel (%p318) target = $region60
        $region59: #{autocomplete_forward.1} parent=55 // pred_region
          %322 = dma.done [#allocation7], 4096
        $region60: #{autocomplete_forward.1} parent=55 // pred_fallthru
          _
        // Predicated region
        $region61: #{autocomplete_forward.1} parent=55 // pred_check
          %p323 = pneg %p148
        $region62: #{autocomplete_forward.1} parent=55 // pred_check_branch
          %325 = sbr.rel (%p323) target = $region64
        $region63: #{autocomplete_forward.1} parent=55 // pred_region
          %327 = dma.done [#allocation9], 4096
        $region64: #{autocomplete_forward.1} parent=55 // pred_fallthru
          _
        %s328 = smul.u32 4, %s22
        %p329 = scmp.lt.s32.totalorder %s328, 7
        %s330 = scalar_select %p329, %s328, 7
        %s331 = smul.addr %s330, 8
        %s332 = scalar_lea.vmem %s0, %s331
        %p333 = pneg %p43
        %p334 = pneg %p40
        %p335 = pneg %p64
        %p336 = pneg %p61
        %p337 = pneg %p85
        %p338 = pneg %p82
        %p339 = pneg %p106
        %p340 = pneg %p103
        %p341 = pneg %p127
        %p342 = pneg %p124
        %p343 = pneg %p148
        %p344 = pneg %p145
        %p345 = pneg %p169
        %p346 = pneg %p166
        %p347 = pneg %p190
        %p348 = pneg %p187
        %p349 = pneg %p211
        %p350 = pneg %p208
        %p351 = pneg %p237
        %p352 = pneg %p234
        %s353 = smul.u32 4, %s22
        %p354 = scmp.lt.s32.totalorder %s353, 7
        %s355 = scalar_select %p354, %s353, 7
        %s356 = smul.addr %s355, 8
        %s357 = scalar_lea.vmem %s9, %s356
        %s358 = smul.u32 4, %s22
        %p359 = scmp.lt.s32.totalorder %s358, 7
        %s360 = scalar_select %p359, %s358, 7
        %s361 = smul.addr %s360, 8
        %s362 = scalar_lea.vmem %s0, %s361
        %s363 = smul.u32 4, %s22
        %s364 = smul.u32 4, %s22
        %p365 = scmp.lt.s32.totalorder %s364, 7
        %s366 = scalar_select %p365, %s364, 7
        %s367 = smul.addr %s366, 8
        %s368 = scalar_lea.vmem %s9, %s367
        %s369 = smul.u32 4, %s22
        %p371 = scmp.eq.s32.totalorder %s22, 0
        // Predicated region
        $region65: #{autocomplete_forward.1} parent=55 // pred_check
          %p372 = pneg %p371
        $region66: #{autocomplete_forward.1} parent=55 // pred_check_branch
          %374 = sbr.rel (%p372) target = $region68
        $region67: #{autocomplete_forward.1} parent=55 // pred_region
          %375 = vst [vmem:[#allocation2] sm:$0xff] 0.0
          %376 = vst [vmem:[#allocation3] sm:$0xff] 0.0
          %377 = vst [vmem:[#allocation4] sm:$0xff] 0.0
          %378 = vst [vmem:[#allocation5] sm:$0xff] 0.0
        $region68: #{autocomplete_forward.1} parent=55 // pred_fallthru
          _
        %v379 = vld [vmem:[%s362] sm:$0xff]
        %v380 = vld [vmem:[%s362 + $0x8] sm:$0xff]
        %v381 = vld [vmem:[%s362 + $0x10] sm:$0xff]
        %v382 = vld [vmem:[%s362 + $0x18] sm:$0xff]
        %v383 = vpack.c.bf16 %v380, %v379
        %v384 = vpack.c.bf16 %v382, %v381
        %v385 = vld [vmem:[%s1] sm:$0xff]
        %v386 = vld [vmem:[%s1 + $0x8] sm:$0xff]
        %v387 = vld [vmem:[%s1 + $0x10] sm:$0xff]
        %v388 = vld [vmem:[%s1 + $0x18] sm:$0xff]
        %v389 = vld [vmem:[%s1 + $0x20] sm:$0xff]
        %v390 = vld [vmem:[%s1 + $0x28] sm:$0xff]
        %v391 = vld [vmem:[%s1 + $0x30] sm:$0xff]
        %v392 = vld [vmem:[%s1 + $0x38] sm:$0xff]
        %v393 = vld [vmem:[%s1 + $0x40] sm:$0xff]
        %v394 = vld [vmem:[%s1 + $0x48] sm:$0xff]
        %v395 = vld [vmem:[%s1 + $0x50] sm:$0xff]
        %v396 = vld [vmem:[%s1 + $0x58] sm:$0xff]
        %v397 = vld [vmem:[%s1 + $0x60] sm:$0xff]
        %v398 = vld [vmem:[%s1 + $0x68] sm:$0xff]
        %v399 = vld [vmem:[%s1 + $0x70] sm:$0xff]
        %v400 = vld [vmem:[%s1 + $0x78] sm:$0xff]
        %v401 = vld [vmem:[%s3] sm:$0xf]
        %v403 = vperm.slane %v401, 0
        %v404 = vperm.slane %v401, 1
        %v405 = vperm.slane %v401, 2
        %v406 = vperm.slane %v401, 3
        %v427 = vunpack.c.l.b16 %v385
        %v428 = vunpack.c.h.b16 %v385
        %v429 = vunpack.c.l.b16 %v386
        %v430 = vunpack.c.h.b16 %v386
        %v431 = vunpack.c.l.b16 %v387
        %v432 = vunpack.c.h.b16 %v387
        %v433 = vunpack.c.l.b16 %v388
        %v434 = vunpack.c.h.b16 %v388
        %v435 = vunpack.c.l.b16 %v389
        %v436 = vunpack.c.h.b16 %v389
        %v437 = vunpack.c.l.b16 %v390
        %v438 = vunpack.c.h.b16 %v390
        %v439 = vunpack.c.l.b16 %v391
        %v440 = vunpack.c.h.b16 %v391
        %v441 = vunpack.c.l.b16 %v392
        %v442 = vunpack.c.h.b16 %v392
        %v443 = vunpack.c.l.b16 %v393
        %v444 = vunpack.c.h.b16 %v393
        %v445 = vunpack.c.l.b16 %v394
        %v446 = vunpack.c.h.b16 %v394
        %v447 = vunpack.c.l.b16 %v395
        %v448 = vunpack.c.h.b16 %v395
        %v449 = vunpack.c.l.b16 %v396
        %v450 = vunpack.c.h.b16 %v396
        %v451 = vunpack.c.l.b16 %v397
        %v452 = vunpack.c.h.b16 %v397
        %v453 = vunpack.c.l.b16 %v398
        %v454 = vunpack.c.h.b16 %v398
        %v455 = vunpack.c.l.b16 %v399
        %v456 = vunpack.c.h.b16 %v399
        %v457 = vunpack.c.l.b16 %v400
        %v458 = vunpack.c.h.b16 %v400
        %v459 = vpack.c.b16 %v431, %v427
        %v460 = vpack.c.b16 %v432, %v428
        %v461 = vpack.c.b16 %v433, %v429
        %v462 = vpack.c.b16 %v434, %v430
        %v463 = vpack.c.b16 %v439, %v435
        %v464 = vpack.c.b16 %v440, %v436
        %v465 = vpack.c.b16 %v441, %v437
        %v466 = vpack.c.b16 %v442, %v438
        %v467 = vpack.c.b16 %v447, %v443
        %v468 = vpack.c.b16 %v448, %v444
        %v469 = vpack.c.b16 %v449, %v445
        %v470 = vpack.c.b16 %v450, %v446
        %v471 = vpack.c.b16 %v455, %v451
        %v472 = vpack.c.b16 %v456, %v452
        %v473 = vpack.c.b16 %v457, %v453
        %v474 = vpack.c.b16 %v458, %v454
        %vm491 = vcmask 523264
        %v493 = vsel %vm491, %v383, 0
        %v496 = vsel %vm491, %v384, 0
        %498 = vmatpush.bf16.msra.mxu0 0
        %499 = vmatpush.bf16.msra.mxu0 0
        %500 = vmatpush.bf16.msra.mxu0 0
        %501 = vmatpush.bf16.msra.mxu0 0
        %502 = vmatpush.bf16.msra.mxu0 %v471
        %503 = vmatpush.bf16.msra.mxu0 %v467
        %504 = vmatpush.bf16.msra.mxu0 %v463
        %505 = vmatpush.bf16.msra.mxu0 %v459
        %506 = vmatmul.bf16.gmra.mxu0 %v493
        %v507 = vpop.f32.mrf.mxu0
        %v508 = vadd.f32 %v403, %v507
        %v509 = vpop.f32.mrf.mxu0
        %v510 = vadd.f32 %v403, %v509
        %511 = vmatmul.bf16.gmra.mxu0 %v496
        %v512 = vpop.f32.mrf.mxu0
        %v513 = vadd.f32 %v403, %v512
        %v514 = vpop.f32.mrf.mxu0
        %v515 = vadd.f32 %v403, %v514
        %516 = vdwg.mxu0
        %517 = vmatpush.bf16.msra.mxu0 0
        %518 = vmatpush.bf16.msra.mxu0 0
        %519 = vmatpush.bf16.msra.mxu0 0
        %520 = vmatpush.bf16.msra.mxu0 0
        %521 = vmatpush.bf16.msra.mxu0 %v472
        %522 = vmatpush.bf16.msra.mxu0 %v468
        %523 = vmatpush.bf16.msra.mxu0 %v464
        %524 = vmatpush.bf16.msra.mxu0 %v460
        %525 = vmatmul.bf16.gmra.mxu0 %v493
        %v526 = vpop.f32.mrf.mxu0
        %v527 = vadd.f32 %v404, %v526
        %v528 = vpop.f32.mrf.mxu0
        %v529 = vadd.f32 %v404, %v528
        %530 = vmatmul.bf16.gmra.mxu0 %v496
        %v531 = vpop.f32.mrf.mxu0
        %v532 = vadd.f32 %v404, %v531
        %v533 = vpop.f32.mrf.mxu0
        %v534 = vadd.f32 %v404, %v533
        %535 = vdwg.mxu0
        %536 = vmatpush.bf16.msra.mxu0 0
        %537 = vmatpush.bf16.msra.mxu0 0
        %538 = vmatpush.bf16.msra.mxu0 0
        %539 = vmatpush.bf16.msra.mxu0 0
        %540 = vmatpush.bf16.msra.mxu0 %v473
        %541 = vmatpush.bf16.msra.mxu0 %v469
        %542 = vmatpush.bf16.msra.mxu0 %v465
        %543 = vmatpush.bf16.msra.mxu0 %v461
        %544 = vmatmul.bf16.gmra.mxu0 %v493
        %v545 = vpop.f32.mrf.mxu0
        %v546 = vadd.f32 %v405, %v545
        %v547 = vpop.f32.mrf.mxu0
        %v548 = vadd.f32 %v405, %v547
        %549 = vmatmul.bf16.gmra.mxu0 %v496
        %v550 = vpop.f32.mrf.mxu0
        %v551 = vadd.f32 %v405, %v550
        %v552 = vpop.f32.mrf.mxu0
        %v553 = vadd.f32 %v405, %v552
        %554 = vdwg.mxu0
        %555 = vmatpush.bf16.msra.mxu0 0
        %556 = vmatpush.bf16.msra.mxu0 0
        %557 = vmatpush.bf16.msra.mxu0 0
        %558 = vmatpush.bf16.msra.mxu0 0
        %559 = vmatpush.bf16.msra.mxu0 %v474
        %560 = vmatpush.bf16.msra.mxu0 %v470
        %561 = vmatpush.bf16.msra.mxu0 %v466
        %562 = vmatpush.bf16.msra.mxu0 %v462
        %563 = vmatmul.bf16.gmra.mxu0 %v493
        %v564 = vpop.f32.mrf.mxu0
        %v565 = vadd.f32 %v406, %v564
        %v566 = vpop.f32.mrf.mxu0
        %v567 = vadd.f32 %v406, %v566
        %568 = vmatmul.bf16.gmra.mxu0 %v496
        %v569 = vpop.f32.mrf.mxu0
        %v570 = vadd.f32 %v406, %v569
        %v571 = vpop.f32.mrf.mxu0
        %v572 = vadd.f32 %v406, %v571
        %573 = vdwg.mxu0
        %v574 = vld [vmem:[%s2] sm:$0xff]
        %v575 = vld [vmem:[%s2 + $0x8] sm:$0xff]
        %v576 = vld [vmem:[%s2 + $0x10] sm:$0xff]
        %v577 = vld [vmem:[%s2 + $0x18] sm:$0xff]
        %v578 = vld [vmem:[%s2 + $0x20] sm:$0xff]
        %v579 = vld [vmem:[%s2 + $0x28] sm:$0xff]
        %v580 = vld [vmem:[%s2 + $0x30] sm:$0xff]
        %v581 = vld [vmem:[%s2 + $0x38] sm:$0xff]
        %v582 = vld [vmem:[%s2 + $0x40] sm:$0xff]
        %v583 = vld [vmem:[%s2 + $0x48] sm:$0xff]
        %v584 = vld [vmem:[%s2 + $0x50] sm:$0xff]
        %v585 = vld [vmem:[%s2 + $0x58] sm:$0xff]
        %v586 = vld [vmem:[%s2 + $0x60] sm:$0xff]
        %v587 = vld [vmem:[%s2 + $0x68] sm:$0xff]
        %v588 = vld [vmem:[%s2 + $0x70] sm:$0xff]
        %v589 = vld [vmem:[%s2 + $0x78] sm:$0xff]
        %v590 = vld [vmem:[%s2 + $0x80] sm:$0xff]
        %v591 = vld [vmem:[%s2 + $0x88] sm:$0xff]
        %v592 = vld [vmem:[%s2 + $0x90] sm:$0xff]
        %v593 = vld [vmem:[%s2 + $0x98] sm:$0xff]
        %v594 = vld [vmem:[%s2 + $0xa0] sm:$0xff]
        %v595 = vld [vmem:[%s2 + $0xa8] sm:$0xff]
        %v596 = vld [vmem:[%s2 + $0xb0] sm:$0xff]
        %v597 = vld [vmem:[%s2 + $0xb8] sm:$0xff]
        %v598 = vld [vmem:[%s2 + $0xc0] sm:$0xff]
        %v599 = vld [vmem:[%s2 + $0xc8] sm:$0xff]
        %v600 = vld [vmem:[%s2 + $0xd0] sm:$0xff]
        %v601 = vld [vmem:[%s2 + $0xd8] sm:$0xff]
        %v602 = vld [vmem:[%s2 + $0xe0] sm:$0xff]
        %v603 = vld [vmem:[%s2 + $0xe8] sm:$0xff]
        %v604 = vld [vmem:[%s2 + $0xf0] sm:$0xff]
        %v605 = vld [vmem:[%s2 + $0xf8] sm:$0xff]
        %v606 = vld [vmem:[#allocation2] sm:$0xff]
        %v607 = vld [vmem:[#allocation3] sm:$0xff]
        %v608 = vpack.c.bf16 %v606, %v606
        %v641 = vunpack.c.l.b16 %v574
        %v642 = vunpack.c.h.b16 %v574
        %v643 = vunpack.c.l.b16 %v575
        %v644 = vunpack.c.h.b16 %v575
        %v645 = vunpack.c.l.b16 %v576
        %v646 = vunpack.c.h.b16 %v576
        %v647 = vunpack.c.l.b16 %v577
        %v648 = vunpack.c.h.b16 %v577
        %v649 = vunpack.c.l.b16 %v578
        %v650 = vunpack.c.h.b16 %v578
        %v651 = vunpack.c.l.b16 %v579
        %v652 = vunpack.c.h.b16 %v579
        %v653 = vunpack.c.l.b16 %v580
        %v654 = vunpack.c.h.b16 %v580
        %v655 = vunpack.c.l.b16 %v581
        %v656 = vunpack.c.h.b16 %v581
        %v657 = vunpack.c.l.b16 %v582
        %v658 = vunpack.c.h.b16 %v582
        %v659 = vunpack.c.l.b16 %v583
        %v660 = vunpack.c.h.b16 %v583
        %v661 = vunpack.c.l.b16 %v584
        %v662 = vunpack.c.h.b16 %v584
        %v663 = vunpack.c.l.b16 %v585
        %v664 = vunpack.c.h.b16 %v585
        %v665 = vunpack.c.l.b16 %v586
        %v666 = vunpack.c.h.b16 %v586
        %v667 = vunpack.c.l.b16 %v587
        %v668 = vunpack.c.h.b16 %v587
        %v669 = vunpack.c.l.b16 %v588
        %v670 = vunpack.c.h.b16 %v588
        %v671 = vunpack.c.l.b16 %v589
        %v672 = vunpack.c.h.b16 %v589
        %v673 = vunpack.c.l.b16 %v590
        %v674 = vunpack.c.h.b16 %v590
        %v675 = vunpack.c.l.b16 %v591
        %v676 = vunpack.c.h.b16 %v591
        %v677 = vunpack.c.l.b16 %v592
        %v678 = vunpack.c.h.b16 %v592
        %v679 = vunpack.c.l.b16 %v593
        %v680 = vunpack.c.h.b16 %v593
        %v681 = vunpack.c.l.b16 %v594
        %v682 = vunpack.c.h.b16 %v594
        %v683 = vunpack.c.l.b16 %v595
        %v684 = vunpack.c.h.b16 %v595
        %v685 = vunpack.c.l.b16 %v596
        %v686 = vunpack.c.h.b16 %v596
        %v687 = vunpack.c.l.b16 %v597
        %v688 = vunpack.c.h.b16 %v597
        %v689 = vunpack.c.l.b16 %v598
        %v690 = vunpack.c.h.b16 %v598
        %v691 = vunpack.c.l.b16 %v599
        %v692 = vunpack.c.h.b16 %v599
        %v693 = vunpack.c.l.b16 %v600
        %v694 = vunpack.c.h.b16 %v600
        %v695 = vunpack.c.l.b16 %v601
        %v696 = vunpack.c.h.b16 %v601
        %v697 = vunpack.c.l.b16 %v602
        %v698 = vunpack.c.h.b16 %v602
        %v699 = vunpack.c.l.b16 %v603
        %v700 = vunpack.c.h.b16 %v603
        %v701 = vunpack.c.l.b16 %v604
        %v702 = vunpack.c.h.b16 %v604
        %v703 = vunpack.c.l.b16 %v605
        %v704 = vunpack.c.h.b16 %v605
        %v705 = vpack.c.b16 %v645, %v641
        %v706 = vpack.c.b16 %v646, %v642
        %v707 = vpack.c.b16 %v647, %v643
        %v708 = vpack.c.b16 %v648, %v644
        %v709 = vpack.c.b16 %v653, %v649
        %v710 = vpack.c.b16 %v654, %v650
        %v711 = vpack.c.b16 %v655, %v651
        %v712 = vpack.c.b16 %v656, %v652
        %v713 = vpack.c.b16 %v661, %v657
        %v714 = vpack.c.b16 %v662, %v658
        %v715 = vpack.c.b16 %v663, %v659
        %v716 = vpack.c.b16 %v664, %v660
        %v717 = vpack.c.b16 %v669, %v665
        %v718 = vpack.c.b16 %v670, %v666
        %v719 = vpack.c.b16 %v671, %v667
        %v720 = vpack.c.b16 %v672, %v668
        %v721 = vpack.c.b16 %v677, %v673
        %v722 = vpack.c.b16 %v678, %v674
        %v723 = vpack.c.b16 %v679, %v675
        %v724 = vpack.c.b16 %v680, %v676
        %v725 = vpack.c.b16 %v685, %v681
        %v726 = vpack.c.b16 %v686, %v682
        %v727 = vpack.c.b16 %v687, %v683
        %v728 = vpack.c.b16 %v688, %v684
        %v729 = vpack.c.b16 %v693, %v689
        %v730 = vpack.c.b16 %v694, %v690
        %v731 = vpack.c.b16 %v695, %v691
        %v732 = vpack.c.b16 %v696, %v692
        %v733 = vpack.c.b16 %v701, %v697
        %v734 = vpack.c.b16 %v702, %v698
        %v735 = vpack.c.b16 %v703, %v699
        %v736 = vpack.c.b16 %v704, %v700
        %769 = vmatpush.bf16.msra.mxu0 %v733
        %770 = vmatpush.bf16.msra.mxu0 %v729
        %771 = vmatpush.bf16.msra.mxu0 %v725
        %772 = vmatpush.bf16.msra.mxu0 %v721
        %773 = vmatpush.bf16.msra.mxu0 %v717
        %774 = vmatpush.bf16.msra.mxu0 %v713
        %775 = vmatpush.bf16.msra.mxu0 %v709
        %776 = vmatpush.bf16.msra.mxu0 %v705
        %777 = vmatmul.bf16.gmra.mxu0 %v608
        %v778 = vpop.f32.mrf.mxu0
        %v779 = vadd.f32 0.0, %v778
        %v780 = vpop.f32.mrf.mxu0
        %781 = vdwg.mxu0
        %782 = vmatpush.bf16.msra.mxu0 %v734
        %783 = vmatpush.bf16.msra.mxu0 %v730
        %784 = vmatpush.bf16.msra.mxu0 %v726
        %785 = vmatpush.bf16.msra.mxu0 %v722
        %786 = vmatpush.bf16.msra.mxu0 %v718
        %787 = vmatpush.bf16.msra.mxu0 %v714
        %788 = vmatpush.bf16.msra.mxu0 %v710
        %789 = vmatpush.bf16.msra.mxu0 %v706
        %790 = vmatmul.bf16.gmra.mxu0 %v608
        %v791 = vpop.f32.mrf.mxu0
        %v792 = vadd.f32 0.0, %v791
        %v793 = vpop.f32.mrf.mxu0
        %794 = vdwg.mxu0
        %795 = vmatpush.bf16.msra.mxu0 %v735
        %796 = vmatpush.bf16.msra.mxu0 %v731
        %797 = vmatpush.bf16.msra.mxu0 %v727
        %798 = vmatpush.bf16.msra.mxu0 %v723
        %799 = vmatpush.bf16.msra.mxu0 %v719
        %800 = vmatpush.bf16.msra.mxu0 %v715
        %801 = vmatpush.bf16.msra.mxu0 %v711
        %802 = vmatpush.bf16.msra.mxu0 %v707
        %803 = vmatmul.bf16.gmra.mxu0 %v608
        %v804 = vpop.f32.mrf.mxu0
        %v805 = vadd.f32 0.0, %v804
        %v806 = vpop.f32.mrf.mxu0
        %807 = vdwg.mxu0
        %808 = vmatpush.bf16.msra.mxu0 %v736
        %809 = vmatpush.bf16.msra.mxu0 %v732
        %810 = vmatpush.bf16.msra.mxu0 %v728
        %811 = vmatpush.bf16.msra.mxu0 %v724
        %812 = vmatpush.bf16.msra.mxu0 %v720
        %813 = vmatpush.bf16.msra.mxu0 %v716
        %814 = vmatpush.bf16.msra.mxu0 %v712
        %815 = vmatpush.bf16.msra.mxu0 %v708
        %816 = vmatmul.bf16.gmra.mxu0 %v608
        %v817 = vpop.f32.mrf.mxu0
        %v818 = vadd.f32 0.0, %v817
        %v819 = vpop.f32.mrf.mxu0
        %820 = vdwg.mxu0
        %v821 = vadd.f32 %v508, %v779
        %v822 = vadd.f32 %v527, %v792
        %v823 = vadd.f32 %v546, %v805
        %v824 = vadd.f32 %v565, %v818
        %v825 = vxor.u32 %v821, 2147483648
        %v826 = vmul.f32 %v825, 1.442695
        %v827 = vpow.pop %v826
        %v828 = vadd.f32 %v827, 1.0
        %v829 = vrcp.pop %v828
        %v830 = vmul.f32 %v828, %v829
        %v831 = vsub.f32 1.0, %v830
        %v832 = vmul.f32 %v829, %v831
        %v833 = vadd.f32 %v829, %v832
        %vm834 = vweird.f32 %v828
        %vm835 = vweird.f32 %v829
        %vm836 = vmor %vm834, %vm835
        %v837 = vsel %vm836, %v829, %v833
        %v838 = vand.u32 2147483647, %v828
        %vm839 = vcmp.eq.f32.partialorder %v838, 8.507059e+37
        %v840 = vand.u32 %v828, 2147483648
        %v841 = vor.u32 1.1754944e-38, %v840
        %v842 = vsel %vm839, %v841, %v837
        %v843 = vmul.f32 1.0, %v842
        %v844 = vxor.u32 %v822, 2147483648
        %v845 = vmul.f32 %v844, 1.442695
        %v846 = vpow.pop %v845
        %v847 = vadd.f32 %v846, 1.0
        %v848 = vrcp.pop %v847
        %v849 = vmul.f32 %v847, %v848
        %v850 = vsub.f32 1.0, %v849
        %v851 = vmul.f32 %v848, %v850
        %v852 = vadd.f32 %v848, %v851
        %vm853 = vweird.f32 %v847
        %vm854 = vweird.f32 %v848
        %vm855 = vmor %vm853, %vm854
        %v856 = vsel %vm855, %v848, %v852
        %v857 = vand.u32 2147483647, %v847
        %vm858 = vcmp.eq.f32.partialorder %v857, 8.507059e+37
        %v859 = vand.u32 %v847, 2147483648
        %v860 = vor.u32 1.1754944e-38, %v859
        %v861 = vsel %vm858, %v860, %v856
        %v862 = vmul.f32 1.0, %v861
        %v863 = vtanh.pop %v823
        %v864 = vxor.u32 %v824, 2147483648
        %v865 = vmul.f32 %v864, 1.442695
        %v866 = vpow.pop %v865
        %v867 = vadd.f32 %v866, 1.0
        %v868 = vrcp.pop %v867
        %v869 = vmul.f32 %v867, %v868
        %v870 = vsub.f32 1.0, %v869
        %v871 = vmul.f32 %v868, %v870
        %v872 = vadd.f32 %v868, %v871
        %vm873 = vweird.f32 %v867
        %vm874 = vweird.f32 %v868
        %vm875 = vmor %vm873, %vm874
        %v876 = vsel %vm875, %v868, %v872
        %v877 = vand.u32 2147483647, %v867
        %vm878 = vcmp.eq.f32.partialorder %v877, 8.507059e+37
        %v879 = vand.u32 %v867, 2147483648
        %v880 = vor.u32 1.1754944e-38, %v879
        %v881 = vsel %vm878, %v880, %v876
        %v882 = vmul.f32 1.0, %v881
        %v883 = vmul.f32 %v862, %v607
        %v884 = vmul.f32 %v843, %v863
        %v885 = vadd.f32 %v883, %v884
        %v886 = vtanh.pop %v885
        %v887 = vmul.f32 %v882, %v886
        %v888 = vpack.c.bf16 %v887, %v887
        %889 = vmatpush.bf16.msra.mxu0 %v733
        %890 = vmatpush.bf16.msra.mxu0 %v729
        %891 = vmatpush.bf16.msra.mxu0 %v725
        %892 = vmatpush.bf16.msra.mxu0 %v721
        %893 = vmatpush.bf16.msra.mxu0 %v717
        %894 = vmatpush.bf16.msra.mxu0 %v713
        %895 = vmatpush.bf16.msra.mxu0 %v709
        %896 = vmatpush.bf16.msra.mxu0 %v705
        %897 = vmatmul.bf16.gmra.mxu0 %v888
        %v898 = vpop.f32.mrf.mxu0
        %v899 = vadd.f32 0.0, %v898
        %v900 = vpop.f32.mrf.mxu0
        %901 = vdwg.mxu0
        %902 = vmatpush.bf16.msra.mxu0 %v734
        %903 = vmatpush.bf16.msra.mxu0 %v730
        %904 = vmatpush.bf16.msra.mxu0 %v726
        %905 = vmatpush.bf16.msra.mxu0 %v722
        %906 = vmatpush.bf16.msra.mxu0 %v718
        %907 = vmatpush.bf16.msra.mxu0 %v714
        %908 = vmatpush.bf16.msra.mxu0 %v710
        %909 = vmatpush.bf16.msra.mxu0 %v706
        %910 = vmatmul.bf16.gmra.mxu0 %v888
        %v911 = vpop.f32.mrf.mxu0
        %v912 = vadd.f32 0.0, %v911
        %v913 = vpop.f32.mrf.mxu0
        %914 = vdwg.mxu0
        %915 = vmatpush.bf16.msra.mxu0 %v735
        %916 = vmatpush.bf16.msra.mxu0 %v731
        %917 = vmatpush.bf16.msra.mxu0 %v727
        %918 = vmatpush.bf16.msra.mxu0 %v723
        %919 = vmatpush.bf16.msra.mxu0 %v719
        %920 = vmatpush.bf16.msra.mxu0 %v715
        %921 = vmatpush.bf16.msra.mxu0 %v711
        %922 = vmatpush.bf16.msra.mxu0 %v707
        %923 = vmatmul.bf16.gmra.mxu0 %v888
        %v924 = vpop.f32.mrf.mxu0
        %v925 = vadd.f32 0.0, %v924
        %v926 = vpop.f32.mrf.mxu0
        %927 = vdwg.mxu0
        %928 = vmatpush.bf16.msra.mxu0 %v736
        %929 = vmatpush.bf16.msra.mxu0 %v732
        %930 = vmatpush.bf16.msra.mxu0 %v728
        %931 = vmatpush.bf16.msra.mxu0 %v724
        %932 = vmatpush.bf16.msra.mxu0 %v720
        %933 = vmatpush.bf16.msra.mxu0 %v716
        %934 = vmatpush.bf16.msra.mxu0 %v712
        %935 = vmatpush.bf16.msra.mxu0 %v708
        %936 = vmatmul.bf16.gmra.mxu0 %v888
        %v937 = vpop.f32.mrf.mxu0
        %v938 = vadd.f32 0.0, %v937
        %v939 = vpop.f32.mrf.mxu0
        %940 = vdwg.mxu0
        %v941 = vadd.f32 %v510, %v899
        %v942 = vadd.f32 %v529, %v912
        %v943 = vadd.f32 %v548, %v925
        %v944 = vadd.f32 %v567, %v938
        %v945 = vxor.u32 %v941, 2147483648
        %v946 = vmul.f32 %v945, 1.442695
        %v947 = vpow.pop %v946
        %v948 = vadd.f32 %v947, 1.0
        %v949 = vrcp.pop %v948
        %v950 = vmul.f32 %v948, %v949
        %v951 = vsub.f32 1.0, %v950
        %v952 = vmul.f32 %v949, %v951
        %v953 = vadd.f32 %v949, %v952
        %vm954 = vweird.f32 %v948
        %vm955 = vweird.f32 %v949
        %vm956 = vmor %vm954, %vm955
        %v957 = vsel %vm956, %v949, %v953
        %v958 = vand.u32 2147483647, %v948
        %vm959 = vcmp.eq.f32.partialorder %v958, 8.507059e+37
        %v960 = vand.u32 %v948, 2147483648
        %v961 = vor.u32 1.1754944e-38, %v960
        %v962 = vsel %vm959, %v961, %v957
        %v963 = vmul.f32 1.0, %v962
        %v964 = vxor.u32 %v942, 2147483648
        %v965 = vmul.f32 %v964, 1.442695
        %v966 = vpow.pop %v965
        %v967 = vadd.f32 %v966, 1.0
        %v968 = vrcp.pop %v967
        %v969 = vmul.f32 %v967, %v968
        %v970 = vsub.f32 1.0, %v969
        %v971 = vmul.f32 %v968, %v970
        %v972 = vadd.f32 %v968, %v971
        %vm973 = vweird.f32 %v967
        %vm974 = vweird.f32 %v968
        %vm975 = vmor %vm973, %vm974
        %v976 = vsel %vm975, %v968, %v972
        %v977 = vand.u32 2147483647, %v967
        %vm978 = vcmp.eq.f32.partialorder %v977, 8.507059e+37
        %v979 = vand.u32 %v967, 2147483648
        %v980 = vor.u32 1.1754944e-38, %v979
        %v981 = vsel %vm978, %v980, %v976
        %v982 = vmul.f32 1.0, %v981
        %v983 = vtanh.pop %v943
        %v984 = vxor.u32 %v944, 2147483648
        %v985 = vmul.f32 %v984, 1.442695
        %v986 = vpow.pop %v985
        %v987 = vadd.f32 %v986, 1.0
        %v988 = vrcp.pop %v987
        %v989 = vmul.f32 %v987, %v988
        %v990 = vsub.f32 1.0, %v989
        %v991 = vmul.f32 %v988, %v990
        %v992 = vadd.f32 %v988, %v991
        %vm993 = vweird.f32 %v987
        %vm994 = vweird.f32 %v988
        %vm995 = vmor %vm993, %vm994
        %v996 = vsel %vm995, %v988, %v992
        %v997 = vand.u32 2147483647, %v987
        %vm998 = vcmp.eq.f32.partialorder %v997, 8.507059e+37
        %v999 = vand.u32 %v987, 2147483648
        %v1000 = vor.u32 1.1754944e-38, %v999
        %v1001 = vsel %vm998, %v1000, %v996
        %v1002 = vmul.f32 1.0, %v1001
        %v1003 = vmul.f32 %v982, %v885
        %v1004 = vmul.f32 %v963, %v983
        %v1005 = vadd.f32 %v1003, %v1004
        %v1006 = vtanh.pop %v1005
        %v1007 = vmul.f32 %v1002, %v1006
        %v1008 = vpack.c.bf16 %v1007, %v1007
        %1009 = vmatpush.bf16.msra.mxu0 %v733
        %1010 = vmatpush.bf16.msra.mxu0 %v729
        %1011 = vmatpush.bf16.msra.mxu0 %v725
        %1012 = vmatpush.bf16.msra.mxu0 %v721
        %1013 = vmatpush.bf16.msra.mxu0 %v717
        %1014 = vmatpush.bf16.msra.mxu0 %v713
        %1015 = vmatpush.bf16.msra.mxu0 %v709
        %1016 = vmatpush.bf16.msra.mxu0 %v705
        %1017 = vmatmul.bf16.gmra.mxu0 %v1008
        %v1018 = vpop.f32.mrf.mxu0
        %v1019 = vadd.f32 0.0, %v1018
        %v1020 = vpop.f32.mrf.mxu0
        %1021 = vdwg.mxu0
        %1022 = vmatpush.bf16.msra.mxu0 %v734
        %1023 = vmatpush.bf16.msra.mxu0 %v730
        %1024 = vmatpush.bf16.msra.mxu0 %v726
        %1025 = vmatpush.bf16.msra.mxu0 %v722
        %1026 = vmatpush.bf16.msra.mxu0 %v718
        %1027 = vmatpush.bf16.msra.mxu0 %v714
        %1028 = vmatpush.bf16.msra.mxu0 %v710
        %1029 = vmatpush.bf16.msra.mxu0 %v706
        %1030 = vmatmul.bf16.gmra.mxu0 %v1008
        %v1031 = vpop.f32.mrf.mxu0
        %v1032 = vadd.f32 0.0, %v1031
        %v1033 = vpop.f32.mrf.mxu0
        %1034 = vdwg.mxu0
        %1035 = vmatpush.bf16.msra.mxu0 %v735
        %1036 = vmatpush.bf16.msra.mxu0 %v731
        %1037 = vmatpush.bf16.msra.mxu0 %v727
        %1038 = vmatpush.bf16.msra.mxu0 %v723
        %1039 = vmatpush.bf16.msra.mxu0 %v719
        %1040 = vmatpush.bf16.msra.mxu0 %v715
        %1041 = vmatpush.bf16.msra.mxu0 %v711
        %1042 = vmatpush.bf16.msra.mxu0 %v707
        %1043 = vmatmul.bf16.gmra.mxu0 %v1008
        %v1044 = vpop.f32.mrf.mxu0
        %v1045 = vadd.f32 0.0, %v1044
        %v1046 = vpop.f32.mrf.mxu0
        %1047 = vdwg.mxu0
        %1048 = vmatpush.bf16.msra.mxu0 %v736
        %1049 = vmatpush.bf16.msra.mxu0 %v732
        %1050 = vmatpush.bf16.msra.mxu0 %v728
        %1051 = vmatpush.bf16.msra.mxu0 %v724
        %1052 = vmatpush.bf16.msra.mxu0 %v720
        %1053 = vmatpush.bf16.msra.mxu0 %v716
        %1054 = vmatpush.bf16.msra.mxu0 %v712
        %1055 = vmatpush.bf16.msra.mxu0 %v708
        %1056 = vmatmul.bf16.gmra.mxu0 %v1008
        %v1057 = vpop.f32.mrf.mxu0
        %v1058 = vadd.f32 0.0, %v1057
        %v1059 = vpop.f32.mrf.mxu0
        %1060 = vdwg.mxu0
        %v1061 = vadd.f32 %v513, %v1019
        %v1062 = vadd.f32 %v532, %v1032
        %v1063 = vadd.f32 %v551, %v1045
        %v1064 = vadd.f32 %v570, %v1058
        %v1065 = vxor.u32 %v1061, 2147483648
        %v1066 = vmul.f32 %v1065, 1.442695
        %v1067 = vpow.pop %v1066
        %v1068 = vadd.f32 %v1067, 1.0
        %v1069 = vrcp.pop %v1068
        %v1070 = vmul.f32 %v1068, %v1069
        %v1071 = vsub.f32 1.0, %v1070
        %v1072 = vmul.f32 %v1069, %v1071
        %v1073 = vadd.f32 %v1069, %v1072
        %vm1074 = vweird.f32 %v1068
        %vm1075 = vweird.f32 %v1069
        %vm1076 = vmor %vm1074, %vm1075
        %v1077 = vsel %vm1076, %v1069, %v1073
        %v1078 = vand.u32 2147483647, %v1068
        %vm1079 = vcmp.eq.f32.partialorder %v1078, 8.507059e+37
        %v1080 = vand.u32 %v1068, 2147483648
        %v1081 = vor.u32 1.1754944e-38, %v1080
        %v1082 = vsel %vm1079, %v1081, %v1077
        %v1083 = vmul.f32 1.0, %v1082
        %v1084 = vxor.u32 %v1062, 2147483648
        %v1085 = vmul.f32 %v1084, 1.442695
        %v1086 = vpow.pop %v1085
        %v1087 = vadd.f32 %v1086, 1.0
        %v1088 = vrcp.pop %v1087
        %v1089 = vmul.f32 %v1087, %v1088
        %v1090 = vsub.f32 1.0, %v1089
        %v1091 = vmul.f32 %v1088, %v1090
        %v1092 = vadd.f32 %v1088, %v1091
        %vm1093 = vweird.f32 %v1087
        %vm1094 = vweird.f32 %v1088
        %vm1095 = vmor %vm1093, %vm1094
        %v1096 = vsel %vm1095, %v1088, %v1092
        %v1097 = vand.u32 2147483647, %v1087
        %vm1098 = vcmp.eq.f32.partialorder %v1097, 8.507059e+37
        %v1099 = vand.u32 %v1087, 2147483648
        %v1100 = vor.u32 1.1754944e-38, %v1099
        %v1101 = vsel %vm1098, %v1100, %v1096
        %v1102 = vmul.f32 1.0, %v1101
        %v1103 = vtanh.pop %v1063
        %v1104 = vxor.u32 %v1064, 2147483648
        %v1105 = vmul.f32 %v1104, 1.442695
        %v1106 = vpow.pop %v1105
        %v1107 = vadd.f32 %v1106, 1.0
        %v1108 = vrcp.pop %v1107
        %v1109 = vmul.f32 %v1107, %v1108
        %v1110 = vsub.f32 1.0, %v1109
        %v1111 = vmul.f32 %v1108, %v1110
        %v1112 = vadd.f32 %v1108, %v1111
        %vm1113 = vweird.f32 %v1107
        %vm1114 = vweird.f32 %v1108
        %vm1115 = vmor %vm1113, %vm1114
        %v1116 = vsel %vm1115, %v1108, %v1112
        %v1117 = vand.u32 2147483647, %v1107
        %vm1118 = vcmp.eq.f32.partialorder %v1117, 8.507059e+37
        %v1119 = vand.u32 %v1107, 2147483648
        %v1120 = vor.u32 1.1754944e-38, %v1119
        %v1121 = vsel %vm1118, %v1120, %v1116
        %v1122 = vmul.f32 1.0, %v1121
        %v1123 = vmul.f32 %v1102, %v1005
        %v1124 = vmul.f32 %v1083, %v1103
        %v1125 = vadd.f32 %v1123, %v1124
        %v1126 = vtanh.pop %v1125
        %v1127 = vmul.f32 %v1122, %v1126
        %v1128 = vpack.c.bf16 %v1127, %v1127
        %1129 = vmatpush.bf16.msra.mxu0 %v733
        %1130 = vmatpush.bf16.msra.mxu0 %v729
        %1131 = vmatpush.bf16.msra.mxu0 %v725
        %1132 = vmatpush.bf16.msra.mxu0 %v721
        %1133 = vmatpush.bf16.msra.mxu0 %v717
        %1134 = vmatpush.bf16.msra.mxu0 %v713
        %1135 = vmatpush.bf16.msra.mxu0 %v709
        %1136 = vmatpush.bf16.msra.mxu0 %v705
        %1137 = vmatmul.bf16.gmra.mxu0 %v1128
        %v1138 = vpop.f32.mrf.mxu0
        %v1139 = vadd.f32 0.0, %v1138
        %v1140 = vpop.f32.mrf.mxu0
        %1141 = vdwg.mxu0
        %1142 = vmatpush.bf16.msra.mxu0 %v734
        %1143 = vmatpush.bf16.msra.mxu0 %v730
        %1144 = vmatpush.bf16.msra.mxu0 %v726
        %1145 = vmatpush.bf16.msra.mxu0 %v722
        %1146 = vmatpush.bf16.msra.mxu0 %v718
        %1147 = vmatpush.bf16.msra.mxu0 %v714
        %1148 = vmatpush.bf16.msra.mxu0 %v710
        %1149 = vmatpush.bf16.msra.mxu0 %v706
        %1150 = vmatmul.bf16.gmra.mxu0 %v1128
        %v1151 = vpop.f32.mrf.mxu0
        %v1152 = vadd.f32 0.0, %v1151
        %v1153 = vpop.f32.mrf.mxu0
        %1154 = vdwg.mxu0
        %1155 = vmatpush.bf16.msra.mxu0 %v735
        %1156 = vmatpush.bf16.msra.mxu0 %v731
        %1157 = vmatpush.bf16.msra.mxu0 %v727
        %1158 = vmatpush.bf16.msra.mxu0 %v723
        %1159 = vmatpush.bf16.msra.mxu0 %v719
        %1160 = vmatpush.bf16.msra.mxu0 %v715
        %1161 = vmatpush.bf16.msra.mxu0 %v711
        %1162 = vmatpush.bf16.msra.mxu0 %v707
        %1163 = vmatmul.bf16.gmra.mxu0 %v1128
        %v1164 = vpop.f32.mrf.mxu0
        %v1165 = vadd.f32 0.0, %v1164
        %v1166 = vpop.f32.mrf.mxu0
        %1167 = vdwg.mxu0
        %1168 = vmatpush.bf16.msra.mxu0 %v736
        %1169 = vmatpush.bf16.msra.mxu0 %v732
        %1170 = vmatpush.bf16.msra.mxu0 %v728
        %1171 = vmatpush.bf16.msra.mxu0 %v724
        %1172 = vmatpush.bf16.msra.mxu0 %v720
        %1173 = vmatpush.bf16.msra.mxu0 %v716
        %1174 = vmatpush.bf16.msra.mxu0 %v712
        %1175 = vmatpush.bf16.msra.mxu0 %v708
        %1176 = vmatmul.bf16.gmra.mxu0 %v1128
        %v1177 = vpop.f32.mrf.mxu0
        %v1178 = vadd.f32 0.0, %v1177
        %v1179 = vpop.f32.mrf.mxu0
        %1180 = vdwg.mxu0
        %v1181 = vadd.f32 %v515, %v1139
        %v1182 = vadd.f32 %v534, %v1152
        %v1183 = vadd.f32 %v553, %v1165
        %v1184 = vadd.f32 %v572, %v1178
        %v1185 = vxor.u32 %v1181, 2147483648
        %v1186 = vmul.f32 %v1185, 1.442695
        %v1187 = vpow.pop %v1186
        %v1188 = vadd.f32 %v1187, 1.0
        %v1189 = vrcp.pop %v1188
        %v1190 = vmul.f32 %v1188, %v1189
        %v1191 = vsub.f32 1.0, %v1190
        %v1192 = vmul.f32 %v1189, %v1191
        %v1193 = vadd.f32 %v1189, %v1192
        %vm1194 = vweird.f32 %v1188
        %vm1195 = vweird.f32 %v1189
        %vm1196 = vmor %vm1194, %vm1195
        %v1197 = vsel %vm1196, %v1189, %v1193
        %v1198 = vand.u32 2147483647, %v1188
        %vm1199 = vcmp.eq.f32.partialorder %v1198, 8.507059e+37
        %v1200 = vand.u32 %v1188, 2147483648
        %v1201 = vor.u32 1.1754944e-38, %v1200
        %v1202 = vsel %vm1199, %v1201, %v1197
        %v1203 = vmul.f32 1.0, %v1202
        %v1204 = vxor.u32 %v1182, 2147483648
        %v1205 = vmul.f32 %v1204, 1.442695
        %v1206 = vpow.pop %v1205
        %v1207 = vadd.f32 %v1206, 1.0
        %v1208 = vrcp.pop %v1207
        %v1209 = vmul.f32 %v1207, %v1208
        %v1210 = vsub.f32 1.0, %v1209
        %v1211 = vmul.f32 %v1208, %v1210
        %v1212 = vadd.f32 %v1208, %v1211
        %vm1213 = vweird.f32 %v1207
        %vm1214 = vweird.f32 %v1208
        %vm1215 = vmor %vm1213, %vm1214
        %v1216 = vsel %vm1215, %v1208, %v1212
        %v1217 = vand.u32 2147483647, %v1207
        %vm1218 = vcmp.eq.f32.partialorder %v1217, 8.507059e+37
        %v1219 = vand.u32 %v1207, 2147483648
        %v1220 = vor.u32 1.1754944e-38, %v1219
        %v1221 = vsel %vm1218, %v1220, %v1216
        %v1222 = vmul.f32 1.0, %v1221
        %v1223 = vtanh.pop %v1183
        %v1224 = vxor.u32 %v1184, 2147483648
        %v1225 = vmul.f32 %v1224, 1.442695
        %v1226 = vpow.pop %v1225
        %v1227 = vadd.f32 %v1226, 1.0
        %v1228 = vrcp.pop %v1227
        %v1229 = vmul.f32 %v1227, %v1228
        %v1230 = vsub.f32 1.0, %v1229
        %v1231 = vmul.f32 %v1228, %v1230
        %v1232 = vadd.f32 %v1228, %v1231
        %vm1233 = vweird.f32 %v1227
        %vm1234 = vweird.f32 %v1228
        %vm1235 = vmor %vm1233, %vm1234
        %v1236 = vsel %vm1235, %v1228, %v1232
        %v1237 = vand.u32 2147483647, %v1227
        %vm1238 = vcmp.eq.f32.partialorder %v1237, 8.507059e+37
        %v1239 = vand.u32 %v1227, 2147483648
        %v1240 = vor.u32 1.1754944e-38, %v1239
        %v1241 = vsel %vm1238, %v1240, %v1236
        %v1242 = vmul.f32 1.0, %v1241
        %v1243 = vmul.f32 %v1222, %v1125
        %v1244 = vmul.f32 %v1203, %v1223
        %v1245 = vadd.f32 %v1243, %v1244
        %v1246 = vtanh.pop %v1245
        %v1247 = vmul.f32 %v1242, %v1246
        %1248 = vst [vmem:[#allocation2] sm:$0xff] %v1247
        %1249 = vst [vmem:[#allocation3] sm:$0xff] %v1245
        %v1250 = vpack.c.bf16 %v1007, %v887
        %v1251 = vpack.c.bf16 %v1247, %v1127
        %v1252 = vld [vmem:[#allocation6] sm:$0xff]
        %v1253 = vld [vmem:[#allocation6 + $0x8] sm:$0xff]
        %v1254 = vld [vmem:[#allocation6 + $0x10] sm:$0xff]
        %v1255 = vld [vmem:[#allocation6 + $0x18] sm:$0xff]
        %v1256 = vld [vmem:[#allocation6 + $0x20] sm:$0xff]
        %v1257 = vld [vmem:[#allocation6 + $0x28] sm:$0xff]
        %v1258 = vld [vmem:[#allocation6 + $0x30] sm:$0xff]
        %v1259 = vld [vmem:[#allocation6 + $0x38] sm:$0xff]
        %v1260 = vld [vmem:[#allocation6 + $0x40] sm:$0xff]
        %v1261 = vld [vmem:[#allocation6 + $0x48] sm:$0xff]
        %v1262 = vld [vmem:[#allocation6 + $0x50] sm:$0xff]
        %v1263 = vld [vmem:[#allocation6 + $0x58] sm:$0xff]
        %v1264 = vld [vmem:[#allocation6 + $0x60] sm:$0xff]
        %v1265 = vld [vmem:[#allocation6 + $0x68] sm:$0xff]
        %v1266 = vld [vmem:[#allocation6 + $0x70] sm:$0xff]
        %v1267 = vld [vmem:[#allocation6 + $0x78] sm:$0xff]
        %v1268 = vld [vmem:[#allocation6 + $0x80] sm:$0xff]
        %v1269 = vld [vmem:[#allocation6 + $0x88] sm:$0xff]
        %v1270 = vld [vmem:[#allocation6 + $0x90] sm:$0xff]
        %v1271 = vld [vmem:[#allocation6 + $0x98] sm:$0xff]
        %v1272 = vld [vmem:[#allocation6 + $0xa0] sm:$0xff]
        %v1273 = vld [vmem:[#allocation6 + $0xa8] sm:$0xff]
        %v1274 = vld [vmem:[#allocation6 + $0xb0] sm:$0xff]
        %v1275 = vld [vmem:[#allocation6 + $0xb8] sm:$0xff]
        %v1276 = vld [vmem:[#allocation6 + $0xc0] sm:$0xff]
        %v1277 = vld [vmem:[#allocation6 + $0xc8] sm:$0xff]
        %v1278 = vld [vmem:[#allocation6 + $0xd0] sm:$0xff]
        %v1279 = vld [vmem:[#allocation6 + $0xd8] sm:$0xff]
        %v1280 = vld [vmem:[#allocation6 + $0xe0] sm:$0xff]
        %v1281 = vld [vmem:[#allocation6 + $0xe8] sm:$0xff]
        %v1282 = vld [vmem:[#allocation6 + $0xf0] sm:$0xff]
        %v1283 = vld [vmem:[#allocation6 + $0xf8] sm:$0xff]
        %v1284 = vld [vmem:[%s6] sm:$0xf]
        %v1286 = vperm.slane %v1284, 0
        %v1287 = vperm.slane %v1284, 1
        %v1288 = vperm.slane %v1284, 2
        %v1289 = vperm.slane %v1284, 3
        %v1326 = vunpack.c.l.b16 %v1252
        %v1327 = vunpack.c.h.b16 %v1252
        %v1328 = vunpack.c.l.b16 %v1253
        %v1329 = vunpack.c.h.b16 %v1253
        %v1330 = vunpack.c.l.b16 %v1254
        %v1331 = vunpack.c.h.b16 %v1254
        %v1332 = vunpack.c.l.b16 %v1255
        %v1333 = vunpack.c.h.b16 %v1255
        %v1334 = vunpack.c.l.b16 %v1256
        %v1335 = vunpack.c.h.b16 %v1256
        %v1336 = vunpack.c.l.b16 %v1257
        %v1337 = vunpack.c.h.b16 %v1257
        %v1338 = vunpack.c.l.b16 %v1258
        %v1339 = vunpack.c.h.b16 %v1258
        %v1340 = vunpack.c.l.b16 %v1259
        %v1341 = vunpack.c.h.b16 %v1259
        %v1342 = vunpack.c.l.b16 %v1260
        %v1343 = vunpack.c.h.b16 %v1260
        %v1344 = vunpack.c.l.b16 %v1261
        %v1345 = vunpack.c.h.b16 %v1261
        %v1346 = vunpack.c.l.b16 %v1262
        %v1347 = vunpack.c.h.b16 %v1262
        %v1348 = vunpack.c.l.b16 %v1263
        %v1349 = vunpack.c.h.b16 %v1263
        %v1350 = vunpack.c.l.b16 %v1264
        %v1351 = vunpack.c.h.b16 %v1264
        %v1352 = vunpack.c.l.b16 %v1265
        %v1353 = vunpack.c.h.b16 %v1265
        %v1354 = vunpack.c.l.b16 %v1266
        %v1355 = vunpack.c.h.b16 %v1266
        %v1356 = vunpack.c.l.b16 %v1267
        %v1357 = vunpack.c.h.b16 %v1267
        %v1358 = vunpack.c.l.b16 %v1268
        %v1359 = vunpack.c.h.b16 %v1268
        %v1360 = vunpack.c.l.b16 %v1269
        %v1361 = vunpack.c.h.b16 %v1269
        %v1362 = vunpack.c.l.b16 %v1270
        %v1363 = vunpack.c.h.b16 %v1270
        %v1364 = vunpack.c.l.b16 %v1271
        %v1365 = vunpack.c.h.b16 %v1271
        %v1366 = vunpack.c.l.b16 %v1272
        %v1367 = vunpack.c.h.b16 %v1272
        %v1368 = vunpack.c.l.b16 %v1273
        %v1369 = vunpack.c.h.b16 %v1273
        %v1370 = vunpack.c.l.b16 %v1274
        %v1371 = vunpack.c.h.b16 %v1274
        %v1372 = vunpack.c.l.b16 %v1275
        %v1373 = vunpack.c.h.b16 %v1275
        %v1374 = vunpack.c.l.b16 %v1276
        %v1375 = vunpack.c.h.b16 %v1276
        %v1376 = vunpack.c.l.b16 %v1277
        %v1377 = vunpack.c.h.b16 %v1277
        %v1378 = vunpack.c.l.b16 %v1278
        %v1379 = vunpack.c.h.b16 %v1278
        %v1380 = vunpack.c.l.b16 %v1279
        %v1381 = vunpack.c.h.b16 %v1279
        %v1382 = vunpack.c.l.b16 %v1280
        %v1383 = vunpack.c.h.b16 %v1280
        %v1384 = vunpack.c.l.b16 %v1281
        %v1385 = vunpack.c.h.b16 %v1281
        %v1386 = vunpack.c.l.b16 %v1282
        %v1387 = vunpack.c.h.b16 %v1282
        %v1388 = vunpack.c.l.b16 %v1283
        %v1389 = vunpack.c.h.b16 %v1283
        %v1390 = vpack.c.b16 %v1330, %v1326
        %v1391 = vpack.c.b16 %v1331, %v1327
        %v1392 = vpack.c.b16 %v1332, %v1328
        %v1393 = vpack.c.b16 %v1333, %v1329
        %v1394 = vpack.c.b16 %v1338, %v1334
        %v1395 = vpack.c.b16 %v1339, %v1335
        %v1396 = vpack.c.b16 %v1340, %v1336
        %v1397 = vpack.c.b16 %v1341, %v1337
        %v1398 = vpack.c.b16 %v1346, %v1342
        %v1399 = vpack.c.b16 %v1347, %v1343
        %v1400 = vpack.c.b16 %v1348, %v1344
        %v1401 = vpack.c.b16 %v1349, %v1345
        %v1402 = vpack.c.b16 %v1354, %v1350
        %v1403 = vpack.c.b16 %v1355, %v1351
        %v1404 = vpack.c.b16 %v1356, %v1352
        %v1405 = vpack.c.b16 %v1357, %v1353
        %v1406 = vpack.c.b16 %v1362, %v1358
        %v1407 = vpack.c.b16 %v1363, %v1359
        %v1408 = vpack.c.b16 %v1364, %v1360
        %v1409 = vpack.c.b16 %v1365, %v1361
        %v1410 = vpack.c.b16 %v1370, %v1366
        %v1411 = vpack.c.b16 %v1371, %v1367
        %v1412 = vpack.c.b16 %v1372, %v1368
        %v1413 = vpack.c.b16 %v1373, %v1369
        %v1414 = vpack.c.b16 %v1378, %v1374
        %v1415 = vpack.c.b16 %v1379, %v1375
        %v1416 = vpack.c.b16 %v1380, %v1376
        %v1417 = vpack.c.b16 %v1381, %v1377
        %v1418 = vpack.c.b16 %v1386, %v1382
        %v1419 = vpack.c.b16 %v1387, %v1383
        %v1420 = vpack.c.b16 %v1388, %v1384
        %v1421 = vpack.c.b16 %v1389, %v1385
        %1454 = vmatpush.bf16.msra.mxu0 %v1418
        %1455 = vmatpush.bf16.msra.mxu0 %v1414
        %1456 = vmatpush.bf16.msra.mxu0 %v1410
        %1457 = vmatpush.bf16.msra.mxu0 %v1406
        %1458 = vmatpush.bf16.msra.mxu0 %v1402
        %1459 = vmatpush.bf16.msra.mxu0 %v1398
        %1460 = vmatpush.bf16.msra.mxu0 %v1394
        %1461 = vmatpush.bf16.msra.mxu0 %v1390
        %1462 = vmatmul.bf16.gmra.mxu0 %v1250
        %v1463 = vpop.f32.mrf.mxu0
        %v1464 = vadd.f32 %v1286, %v1463
        %v1465 = vpop.f32.mrf.mxu0
        %v1466 = vadd.f32 %v1286, %v1465
        %1467 = vmatmul.bf16.gmra.mxu0 %v1251
        %v1468 = vpop.f32.mrf.mxu0
        %v1469 = vadd.f32 %v1286, %v1468
        %v1470 = vpop.f32.mrf.mxu0
        %v1471 = vadd.f32 %v1286, %v1470
        %1472 = vdwg.mxu0
        %1473 = vmatpush.bf16.msra.mxu0 %v1419
        %1474 = vmatpush.bf16.msra.mxu0 %v1415
        %1475 = vmatpush.bf16.msra.mxu0 %v1411
        %1476 = vmatpush.bf16.msra.mxu0 %v1407
        %1477 = vmatpush.bf16.msra.mxu0 %v1403
        %1478 = vmatpush.bf16.msra.mxu0 %v1399
        %1479 = vmatpush.bf16.msra.mxu0 %v1395
        %1480 = vmatpush.bf16.msra.mxu0 %v1391
        %1481 = vmatmul.bf16.gmra.mxu0 %v1250
        %v1482 = vpop.f32.mrf.mxu0
        %v1483 = vadd.f32 %v1287, %v1482
        %v1484 = vpop.f32.mrf.mxu0
        %v1485 = vadd.f32 %v1287, %v1484
        %1486 = vmatmul.bf16.gmra.mxu0 %v1251
        %v1487 = vpop.f32.mrf.mxu0
        %v1488 = vadd.f32 %v1287, %v1487
        %v1489 = vpop.f32.mrf.mxu0
        %v1490 = vadd.f32 %v1287, %v1489
        %1491 = vdwg.mxu0
        %1492 = vmatpush.bf16.msra.mxu0 %v1420
        %1493 = vmatpush.bf16.msra.mxu0 %v1416
        %1494 = vmatpush.bf16.msra.mxu0 %v1412
        %1495 = vmatpush.bf16.msra.mxu0 %v1408
        %1496 = vmatpush.bf16.msra.mxu0 %v1404
        %1497 = vmatpush.bf16.msra.mxu0 %v1400
        %1498 = vmatpush.bf16.msra.mxu0 %v1396
        %1499 = vmatpush.bf16.msra.mxu0 %v1392
        %1500 = vmatmul.bf16.gmra.mxu0 %v1250
        %v1501 = vpop.f32.mrf.mxu0
        %v1502 = vadd.f32 %v1288, %v1501
        %v1503 = vpop.f32.mrf.mxu0
        %v1504 = vadd.f32 %v1288, %v1503
        %1505 = vmatmul.bf16.gmra.mxu0 %v1251
        %v1506 = vpop.f32.mrf.mxu0
        %v1507 = vadd.f32 %v1288, %v1506
        %v1508 = vpop.f32.mrf.mxu0
        %v1509 = vadd.f32 %v1288, %v1508
        %1510 = vdwg.mxu0
        %1511 = vmatpush.bf16.msra.mxu0 %v1421
        %1512 = vmatpush.bf16.msra.mxu0 %v1417
        %1513 = vmatpush.bf16.msra.mxu0 %v1413
        %1514 = vmatpush.bf16.msra.mxu0 %v1409
        %1515 = vmatpush.bf16.msra.mxu0 %v1405
        %1516 = vmatpush.bf16.msra.mxu0 %v1401
        %1517 = vmatpush.bf16.msra.mxu0 %v1397
        %1518 = vmatpush.bf16.msra.mxu0 %v1393
        %1519 = vmatmul.bf16.gmra.mxu0 %v1250
        %v1520 = vpop.f32.mrf.mxu0
        %v1521 = vadd.f32 %v1289, %v1520
        %v1522 = vpop.f32.mrf.mxu0
        %v1523 = vadd.f32 %v1289, %v1522
        %1524 = vmatmul.bf16.gmra.mxu0 %v1251
        %v1525 = vpop.f32.mrf.mxu0
        %v1526 = vadd.f32 %v1289, %v1525
        %v1527 = vpop.f32.mrf.mxu0
        %v1528 = vadd.f32 %v1289, %v1527
        %1529 = vdwg.mxu0
        %v1530 = vld [vmem:[#allocation8] sm:$0xff]
        %v1531 = vld [vmem:[#allocation8 + $0x8] sm:$0xff]
        %v1532 = vld [vmem:[#allocation8 + $0x10] sm:$0xff]
        %v1533 = vld [vmem:[#allocation8 + $0x18] sm:$0xff]
        %v1534 = vld [vmem:[#allocation8 + $0x20] sm:$0xff]
        %v1535 = vld [vmem:[#allocation8 + $0x28] sm:$0xff]
        %v1536 = vld [vmem:[#allocation8 + $0x30] sm:$0xff]
        %v1537 = vld [vmem:[#allocation8 + $0x38] sm:$0xff]
        %v1538 = vld [vmem:[#allocation8 + $0x40] sm:$0xff]
        %v1539 = vld [vmem:[#allocation8 + $0x48] sm:$0xff]
        %v1540 = vld [vmem:[#allocation8 + $0x50] sm:$0xff]
        %v1541 = vld [vmem:[#allocation8 + $0x58] sm:$0xff]
        %v1542 = vld [vmem:[#allocation8 + $0x60] sm:$0xff]
        %v1543 = vld [vmem:[#allocation8 + $0x68] sm:$0xff]
        %v1544 = vld [vmem:[#allocation8 + $0x70] sm:$0xff]
        %v1545 = vld [vmem:[#allocation8 + $0x78] sm:$0xff]
        %v1546 = vld [vmem:[#allocation8 + $0x80] sm:$0xff]
        %v1547 = vld [vmem:[#allocation8 + $0x88] sm:$0xff]
        %v1548 = vld [vmem:[#allocation8 + $0x90] sm:$0xff]
        %v1549 = vld [vmem:[#allocation8 + $0x98] sm:$0xff]
        %v1550 = vld [vmem:[#allocation8 + $0xa0] sm:$0xff]
        %v1551 = vld [vmem:[#allocation8 + $0xa8] sm:$0xff]
        %v1552 = vld [vmem:[#allocation8 + $0xb0] sm:$0xff]
        %v1553 = vld [vmem:[#allocation8 + $0xb8] sm:$0xff]
        %v1554 = vld [vmem:[#allocation8 + $0xc0] sm:$0xff]
        %v1555 = vld [vmem:[#allocation8 + $0xc8] sm:$0xff]
        %v1556 = vld [vmem:[#allocation8 + $0xd0] sm:$0xff]
        %v1557 = vld [vmem:[#allocation8 + $0xd8] sm:$0xff]
        %v1558 = vld [vmem:[#allocation8 + $0xe0] sm:$0xff]
        %v1559 = vld [vmem:[#allocation8 + $0xe8] sm:$0xff]
        %v1560 = vld [vmem:[#allocation8 + $0xf0] sm:$0xff]
        %v1561 = vld [vmem:[#allocation8 + $0xf8] sm:$0xff]
        %v1562 = vld [vmem:[#allocation4] sm:$0xff]
        %v1563 = vld [vmem:[#allocation5] sm:$0xff]
        %v1564 = vpack.c.bf16 %v1562, %v1562
        %v1597 = vunpack.c.l.b16 %v1530
        %v1598 = vunpack.c.h.b16 %v1530
        %v1599 = vunpack.c.l.b16 %v1531
        %v1600 = vunpack.c.h.b16 %v1531
        %v1601 = vunpack.c.l.b16 %v1532
        %v1602 = vunpack.c.h.b16 %v1532
        %v1603 = vunpack.c.l.b16 %v1533
        %v1604 = vunpack.c.h.b16 %v1533
        %v1605 = vunpack.c.l.b16 %v1534
        %v1606 = vunpack.c.h.b16 %v1534
        %v1607 = vunpack.c.l.b16 %v1535
        %v1608 = vunpack.c.h.b16 %v1535
        %v1609 = vunpack.c.l.b16 %v1536
        %v1610 = vunpack.c.h.b16 %v1536
        %v1611 = vunpack.c.l.b16 %v1537
        %v1612 = vunpack.c.h.b16 %v1537
        %v1613 = vunpack.c.l.b16 %v1538
        %v1614 = vunpack.c.h.b16 %v1538
        %v1615 = vunpack.c.l.b16 %v1539
        %v1616 = vunpack.c.h.b16 %v1539
        %v1617 = vunpack.c.l.b16 %v1540
        %v1618 = vunpack.c.h.b16 %v1540
        %v1619 = vunpack.c.l.b16 %v1541
        %v1620 = vunpack.c.h.b16 %v1541
        %v1621 = vunpack.c.l.b16 %v1542
        %v1622 = vunpack.c.h.b16 %v1542
        %v1623 = vunpack.c.l.b16 %v1543
        %v1624 = vunpack.c.h.b16 %v1543
        %v1625 = vunpack.c.l.b16 %v1544
        %v1626 = vunpack.c.h.b16 %v1544
        %v1627 = vunpack.c.l.b16 %v1545
        %v1628 = vunpack.c.h.b16 %v1545
        %v1629 = vunpack.c.l.b16 %v1546
        %v1630 = vunpack.c.h.b16 %v1546
        %v1631 = vunpack.c.l.b16 %v1547
        %v1632 = vunpack.c.h.b16 %v1547
        %v1633 = vunpack.c.l.b16 %v1548
        %v1634 = vunpack.c.h.b16 %v1548
        %v1635 = vunpack.c.l.b16 %v1549
        %v1636 = vunpack.c.h.b16 %v1549
        %v1637 = vunpack.c.l.b16 %v1550
        %v1638 = vunpack.c.h.b16 %v1550
        %v1639 = vunpack.c.l.b16 %v1551
        %v1640 = vunpack.c.h.b16 %v1551
        %v1641 = vunpack.c.l.b16 %v1552
        %v1642 = vunpack.c.h.b16 %v1552
        %v1643 = vunpack.c.l.b16 %v1553
        %v1644 = vunpack.c.h.b16 %v1553
        %v1645 = vunpack.c.l.b16 %v1554
        %v1646 = vunpack.c.h.b16 %v1554
        %v1647 = vunpack.c.l.b16 %v1555
        %v1648 = vunpack.c.h.b16 %v1555
        %v1649 = vunpack.c.l.b16 %v1556
        %v1650 = vunpack.c.h.b16 %v1556
        %v1651 = vunpack.c.l.b16 %v1557
        %v1652 = vunpack.c.h.b16 %v1557
        %v1653 = vunpack.c.l.b16 %v1558
        %v1654 = vunpack.c.h.b16 %v1558
        %v1655 = vunpack.c.l.b16 %v1559
        %v1656 = vunpack.c.h.b16 %v1559
        %v1657 = vunpack.c.l.b16 %v1560
        %v1658 = vunpack.c.h.b16 %v1560
        %v1659 = vunpack.c.l.b16 %v1561
        %v1660 = vunpack.c.h.b16 %v1561
        %v1661 = vpack.c.b16 %v1601, %v1597
        %v1662 = vpack.c.b16 %v1602, %v1598
        %v1663 = vpack.c.b16 %v1603, %v1599
        %v1664 = vpack.c.b16 %v1604, %v1600
        %v1665 = vpack.c.b16 %v1609, %v1605
        %v1666 = vpack.c.b16 %v1610, %v1606
        %v1667 = vpack.c.b16 %v1611, %v1607
        %v1668 = vpack.c.b16 %v1612, %v1608
        %v1669 = vpack.c.b16 %v1617, %v1613
        %v1670 = vpack.c.b16 %v1618, %v1614
        %v1671 = vpack.c.b16 %v1619, %v1615
        %v1672 = vpack.c.b16 %v1620, %v1616
        %v1673 = vpack.c.b16 %v1625, %v1621
        %v1674 = vpack.c.b16 %v1626, %v1622
        %v1675 = vpack.c.b16 %v1627, %v1623
        %v1676 = vpack.c.b16 %v1628, %v1624
        %v1677 = vpack.c.b16 %v1633, %v1629
        %v1678 = vpack.c.b16 %v1634, %v1630
        %v1679 = vpack.c.b16 %v1635, %v1631
        %v1680 = vpack.c.b16 %v1636, %v1632
        %v1681 = vpack.c.b16 %v1641, %v1637
        %v1682 = vpack.c.b16 %v1642, %v1638
        %v1683 = vpack.c.b16 %v1643, %v1639
        %v1684 = vpack.c.b16 %v1644, %v1640
        %v1685 = vpack.c.b16 %v1649, %v1645
        %v1686 = vpack.c.b16 %v1650, %v1646
        %v1687 = vpack.c.b16 %v1651, %v1647
        %v1688 = vpack.c.b16 %v1652, %v1648
        %v1689 = vpack.c.b16 %v1657, %v1653
        %v1690 = vpack.c.b16 %v1658, %v1654
        %v1691 = vpack.c.b16 %v1659, %v1655
        %v1692 = vpack.c.b16 %v1660, %v1656
        %1725 = vmatpush.bf16.msra.mxu0 %v1689
        %1726 = vmatpush.bf16.msra.mxu0 %v1685
        %1727 = vmatpush.bf16.msra.mxu0 %v1681
        %1728 = vmatpush.bf16.msra.mxu0 %v1677
        %1729 = vmatpush.bf16.msra.mxu0 %v1673
        %1730 = vmatpush.bf16.msra.mxu0 %v1669
        %1731 = vmatpush.bf16.msra.mxu0 %v1665
        %1732 = vmatpush.bf16.msra.mxu0 %v1661
        %1733 = vmatmul.bf16.gmra.mxu0 %v1564
        %v1734 = vpop.f32.mrf.mxu0
        %v1735 = vadd.f32 0.0, %v1734
        %v1736 = vpop.f32.mrf.mxu0
        %1737 = vdwg.mxu0
        %1738 = vmatpush.bf16.msra.mxu0 %v1690
        %1739 = vmatpush.bf16.msra.mxu0 %v1686
        %1740 = vmatpush.bf16.msra.mxu0 %v1682
        %1741 = vmatpush.bf16.msra.mxu0 %v1678
        %1742 = vmatpush.bf16.msra.mxu0 %v1674
        %1743 = vmatpush.bf16.msra.mxu0 %v1670
        %1744 = vmatpush.bf16.msra.mxu0 %v1666
        %1745 = vmatpush.bf16.msra.mxu0 %v1662
        %1746 = vmatmul.bf16.gmra.mxu0 %v1564
        %v1747 = vpop.f32.mrf.mxu0
        %v1748 = vadd.f32 0.0, %v1747
        %v1749 = vpop.f32.mrf.mxu0
        %1750 = vdwg.mxu0
        %1751 = vmatpush.bf16.msra.mxu0 %v1691
        %1752 = vmatpush.bf16.msra.mxu0 %v1687
        %1753 = vmatpush.bf16.msra.mxu0 %v1683
        %1754 = vmatpush.bf16.msra.mxu0 %v1679
        %1755 = vmatpush.bf16.msra.mxu0 %v1675
        %1756 = vmatpush.bf16.msra.mxu0 %v1671
        %1757 = vmatpush.bf16.msra.mxu0 %v1667
        %1758 = vmatpush.bf16.msra.mxu0 %v1663
        %1759 = vmatmul.bf16.gmra.mxu0 %v1564
        %v1760 = vpop.f32.mrf.mxu0
        %v1761 = vadd.f32 0.0, %v1760
        %v1762 = vpop.f32.mrf.mxu0
        %1763 = vdwg.mxu0
        %1764 = vmatpush.bf16.msra.mxu0 %v1692
        %1765 = vmatpush.bf16.msra.mxu0 %v1688
        %1766 = vmatpush.bf16.msra.mxu0 %v1684
        %1767 = vmatpush.bf16.msra.mxu0 %v1680
        %1768 = vmatpush.bf16.msra.mxu0 %v1676
        %1769 = vmatpush.bf16.msra.mxu0 %v1672
        %1770 = vmatpush.bf16.msra.mxu0 %v1668
        %1771 = vmatpush.bf16.msra.mxu0 %v1664
        %1772 = vmatmul.bf16.gmra.mxu0 %v1564
        %v1773 = vpop.f32.mrf.mxu0
        %v1774 = vadd.f32 0.0, %v1773
        %v1775 = vpop.f32.mrf.mxu0
        %1776 = vdwg.mxu0
        %v1777 = vadd.f32 %v1464, %v1735
        %v1778 = vadd.f32 %v1483, %v1748
        %v1779 = vadd.f32 %v1502, %v1761
        %v1780 = vadd.f32 %v1521, %v1774
        %v1781 = vxor.u32 %v1777, 2147483648
        %v1782 = vmul.f32 %v1781, 1.442695
        %v1783 = vpow.pop %v1782
        %v1784 = vadd.f32 %v1783, 1.0
        %v1785 = vrcp.pop %v1784
        %v1786 = vmul.f32 %v1784, %v1785
        %v1787 = vsub.f32 1.0, %v1786
        %v1788 = vmul.f32 %v1785, %v1787
        %v1789 = vadd.f32 %v1785, %v1788
        %vm1790 = vweird.f32 %v1784
        %vm1791 = vweird.f32 %v1785
        %vm1792 = vmor %vm1790, %vm1791
        %v1793 = vsel %vm1792, %v1785, %v1789
        %v1794 = vand.u32 2147483647, %v1784
        %vm1795 = vcmp.eq.f32.partialorder %v1794, 8.507059e+37
        %v1796 = vand.u32 %v1784, 2147483648
        %v1797 = vor.u32 1.1754944e-38, %v1796
        %v1798 = vsel %vm1795, %v1797, %v1793
        %v1799 = vmul.f32 1.0, %v1798
        %v1800 = vxor.u32 %v1778, 2147483648
        %v1801 = vmul.f32 %v1800, 1.442695
        %v1802 = vpow.pop %v1801
        %v1803 = vadd.f32 %v1802, 1.0
        %v1804 = vrcp.pop %v1803
        %v1805 = vmul.f32 %v1803, %v1804
        %v1806 = vsub.f32 1.0, %v1805
        %v1807 = vmul.f32 %v1804, %v1806
        %v1808 = vadd.f32 %v1804, %v1807
        %vm1809 = vweird.f32 %v1803
        %vm1810 = vweird.f32 %v1804
        %vm1811 = vmor %vm1809, %vm1810
        %v1812 = vsel %vm1811, %v1804, %v1808
        %v1813 = vand.u32 2147483647, %v1803
        %vm1814 = vcmp.eq.f32.partialorder %v1813, 8.507059e+37
        %v1815 = vand.u32 %v1803, 2147483648
        %v1816 = vor.u32 1.1754944e-38, %v1815
        %v1817 = vsel %vm1814, %v1816, %v1812
        %v1818 = vmul.f32 1.0, %v1817
        %v1819 = vtanh.pop %v1779
        %v1820 = vxor.u32 %v1780, 2147483648
        %v1821 = vmul.f32 %v1820, 1.442695
        %v1822 = vpow.pop %v1821
        %v1823 = vadd.f32 %v1822, 1.0
        %v1824 = vrcp.pop %v1823
        %v1825 = vmul.f32 %v1823, %v1824
        %v1826 = vsub.f32 1.0, %v1825
        %v1827 = vmul.f32 %v1824, %v1826
        %v1828 = vadd.f32 %v1824, %v1827
        %vm1829 = vweird.f32 %v1823
        %vm1830 = vweird.f32 %v1824
        %vm1831 = vmor %vm1829, %vm1830
        %v1832 = vsel %vm1831, %v1824, %v1828
        %v1833 = vand.u32 2147483647, %v1823
        %vm1834 = vcmp.eq.f32.partialorder %v1833, 8.507059e+37
        %v1835 = vand.u32 %v1823, 2147483648
        %v1836 = vor.u32 1.1754944e-38, %v1835
        %v1837 = vsel %vm1834, %v1836, %v1832
        %v1838 = vmul.f32 1.0, %v1837
        %v1839 = vmul.f32 %v1818, %v1563
        %v1840 = vmul.f32 %v1799, %v1819
        %v1841 = vadd.f32 %v1839, %v1840
        %v1842 = vtanh.pop %v1841
        %v1843 = vmul.f32 %v1838, %v1842
        %v1844 = vpack.c.bf16 %v1843, %v1843
        %1845 = vmatpush.bf16.msra.mxu0 %v1689
        %1846 = vmatpush.bf16.msra.mxu0 %v1685
        %1847 = vmatpush.bf16.msra.mxu0 %v1681
        %1848 = vmatpush.bf16.msra.mxu0 %v1677
        %1849 = vmatpush.bf16.msra.mxu0 %v1673
        %1850 = vmatpush.bf16.msra.mxu0 %v1669
        %1851 = vmatpush.bf16.msra.mxu0 %v1665
        %1852 = vmatpush.bf16.msra.mxu0 %v1661
        %1853 = vmatmul.bf16.gmra.mxu0 %v1844
        %v1854 = vpop.f32.mrf.mxu0
        %v1855 = vadd.f32 0.0, %v1854
        %v1856 = vpop.f32.mrf.mxu0
        %1857 = vdwg.mxu0
        %1858 = vmatpush.bf16.msra.mxu0 %v1690
        %1859 = vmatpush.bf16.msra.mxu0 %v1686
        %1860 = vmatpush.bf16.msra.mxu0 %v1682
        %1861 = vmatpush.bf16.msra.mxu0 %v1678
        %1862 = vmatpush.bf16.msra.mxu0 %v1674
        %1863 = vmatpush.bf16.msra.mxu0 %v1670
        %1864 = vmatpush.bf16.msra.mxu0 %v1666
        %1865 = vmatpush.bf16.msra.mxu0 %v1662
        %1866 = vmatmul.bf16.gmra.mxu0 %v1844
        %v1867 = vpop.f32.mrf.mxu0
        %v1868 = vadd.f32 0.0, %v1867
        %v1869 = vpop.f32.mrf.mxu0
        %1870 = vdwg.mxu0
        %1871 = vmatpush.bf16.msra.mxu0 %v1691
        %1872 = vmatpush.bf16.msra.mxu0 %v1687
        %1873 = vmatpush.bf16.msra.mxu0 %v1683
        %1874 = vmatpush.bf16.msra.mxu0 %v1679
        %1875 = vmatpush.bf16.msra.mxu0 %v1675
        %1876 = vmatpush.bf16.msra.mxu0 %v1671
        %1877 = vmatpush.bf16.msra.mxu0 %v1667
        %1878 = vmatpush.bf16.msra.mxu0 %v1663
        %1879 = vmatmul.bf16.gmra.mxu0 %v1844
        %v1880 = vpop.f32.mrf.mxu0
        %v1881 = vadd.f32 0.0, %v1880
        %v1882 = vpop.f32.mrf.mxu0
        %1883 = vdwg.mxu0
        %1884 = vmatpush.bf16.msra.mxu0 %v1692
        %1885 = vmatpush.bf16.msra.mxu0 %v1688
        %1886 = vmatpush.bf16.msra.mxu0 %v1684
        %1887 = vmatpush.bf16.msra.mxu0 %v1680
        %1888 = vmatpush.bf16.msra.mxu0 %v1676
        %1889 = vmatpush.bf16.msra.mxu0 %v1672
        %1890 = vmatpush.bf16.msra.mxu0 %v1668
        %1891 = vmatpush.bf16.msra.mxu0 %v1664
        %1892 = vmatmul.bf16.gmra.mxu0 %v1844
        %v1893 = vpop.f32.mrf.mxu0
        %v1894 = vadd.f32 0.0, %v1893
        %v1895 = vpop.f32.mrf.mxu0
        %1896 = vdwg.mxu0
        %v1897 = vadd.f32 %v1466, %v1855
        %v1898 = vadd.f32 %v1485, %v1868
        %v1899 = vadd.f32 %v1504, %v1881
        %v1900 = vadd.f32 %v1523, %v1894
        %v1901 = vxor.u32 %v1897, 2147483648
        %v1902 = vmul.f32 %v1901, 1.442695
        %v1903 = vpow.pop %v1902
        %v1904 = vadd.f32 %v1903, 1.0
        %v1905 = vrcp.pop %v1904
        %v1906 = vmul.f32 %v1904, %v1905
        %v1907 = vsub.f32 1.0, %v1906
        %v1908 = vmul.f32 %v1905, %v1907
        %v1909 = vadd.f32 %v1905, %v1908
        %vm1910 = vweird.f32 %v1904
        %vm1911 = vweird.f32 %v1905
        %vm1912 = vmor %vm1910, %vm1911
        %v1913 = vsel %vm1912, %v1905, %v1909
        %v1914 = vand.u32 2147483647, %v1904
        %vm1915 = vcmp.eq.f32.partialorder %v1914, 8.507059e+37
        %v1916 = vand.u32 %v1904, 2147483648
        %v1917 = vor.u32 1.1754944e-38, %v1916
        %v1918 = vsel %vm1915, %v1917, %v1913
        %v1919 = vmul.f32 1.0, %v1918
        %v1920 = vxor.u32 %v1898, 2147483648
        %v1921 = vmul.f32 %v1920, 1.442695
        %v1922 = vpow.pop %v1921
        %v1923 = vadd.f32 %v1922, 1.0
        %v1924 = vrcp.pop %v1923
        %v1925 = vmul.f32 %v1923, %v1924
        %v1926 = vsub.f32 1.0, %v1925
        %v1927 = vmul.f32 %v1924, %v1926
        %v1928 = vadd.f32 %v1924, %v1927
        %vm1929 = vweird.f32 %v1923
        %vm1930 = vweird.f32 %v1924
        %vm1931 = vmor %vm1929, %vm1930
        %v1932 = vsel %vm1931, %v1924, %v1928
        %v1933 = vand.u32 2147483647, %v1923
        %vm1934 = vcmp.eq.f32.partialorder %v1933, 8.507059e+37
        %v1935 = vand.u32 %v1923, 2147483648
        %v1936 = vor.u32 1.1754944e-38, %v1935
        %v1937 = vsel %vm1934, %v1936, %v1932
        %v1938 = vmul.f32 1.0, %v1937
        %v1939 = vtanh.pop %v1899
        %v1940 = vxor.u32 %v1900, 2147483648
        %v1941 = vmul.f32 %v1940, 1.442695
        %v1942 = vpow.pop %v1941
        %v1943 = vadd.f32 %v1942, 1.0
        %v1944 = vrcp.pop %v1943
        %v1945 = vmul.f32 %v1943, %v1944
        %v1946 = vsub.f32 1.0, %v1945
        %v1947 = vmul.f32 %v1944, %v1946
        %v1948 = vadd.f32 %v1944, %v1947
        %vm1949 = vweird.f32 %v1943
        %vm1950 = vweird.f32 %v1944
        %vm1951 = vmor %vm1949, %vm1950
        %v1952 = vsel %vm1951, %v1944, %v1948
        %v1953 = vand.u32 2147483647, %v1943
        %vm1954 = vcmp.eq.f32.partialorder %v1953, 8.507059e+37
        %v1955 = vand.u32 %v1943, 2147483648
        %v1956 = vor.u32 1.1754944e-38, %v1955
        %v1957 = vsel %vm1954, %v1956, %v1952
        %v1958 = vmul.f32 1.0, %v1957
        %v1959 = vmul.f32 %v1938, %v1841
        %v1960 = vmul.f32 %v1919, %v1939
        %v1961 = vadd.f32 %v1959, %v1960
        %v1962 = vtanh.pop %v1961
        %v1963 = vmul.f32 %v1958, %v1962
        %v1964 = vpack.c.bf16 %v1963, %v1963
        %1965 = vmatpush.bf16.msra.mxu0 %v1689
        %1966 = vmatpush.bf16.msra.mxu0 %v1685
        %1967 = vmatpush.bf16.msra.mxu0 %v1681
        %1968 = vmatpush.bf16.msra.mxu0 %v1677
        %1969 = vmatpush.bf16.msra.mxu0 %v1673
        %1970 = vmatpush.bf16.msra.mxu0 %v1669
        %1971 = vmatpush.bf16.msra.mxu0 %v1665
        %1972 = vmatpush.bf16.msra.mxu0 %v1661
        %1973 = vmatmul.bf16.gmra.mxu0 %v1964
        %v1974 = vpop.f32.mrf.mxu0
        %v1975 = vadd.f32 0.0, %v1974
        %v1976 = vpop.f32.mrf.mxu0
        %1977 = vdwg.mxu0
        %1978 = vmatpush.bf16.msra.mxu0 %v1690
        %1979 = vmatpush.bf16.msra.mxu0 %v1686
        %1980 = vmatpush.bf16.msra.mxu0 %v1682
        %1981 = vmatpush.bf16.msra.mxu0 %v1678
        %1982 = vmatpush.bf16.msra.mxu0 %v1674
        %1983 = vmatpush.bf16.msra.mxu0 %v1670
        %1984 = vmatpush.bf16.msra.mxu0 %v1666
        %1985 = vmatpush.bf16.msra.mxu0 %v1662
        %1986 = vmatmul.bf16.gmra.mxu0 %v1964
        %v1987 = vpop.f32.mrf.mxu0
        %v1988 = vadd.f32 0.0, %v1987
        %v1989 = vpop.f32.mrf.mxu0
        %1990 = vdwg.mxu0
        %1991 = vmatpush.bf16.msra.mxu0 %v1691
        %1992 = vmatpush.bf16.msra.mxu0 %v1687
        %1993 = vmatpush.bf16.msra.mxu0 %v1683
        %1994 = vmatpush.bf16.msra.mxu0 %v1679
        %1995 = vmatpush.bf16.msra.mxu0 %v1675
        %1996 = vmatpush.bf16.msra.mxu0 %v1671
        %1997 = vmatpush.bf16.msra.mxu0 %v1667
        %1998 = vmatpush.bf16.msra.mxu0 %v1663
        %1999 = vmatmul.bf16.gmra.mxu0 %v1964
        %v2000 = vpop.f32.mrf.mxu0
        %v2001 = vadd.f32 0.0, %v2000
        %v2002 = vpop.f32.mrf.mxu0
        %2003 = vdwg.mxu0
        %2004 = vmatpush.bf16.msra.mxu0 %v1692
        %2005 = vmatpush.bf16.msra.mxu0 %v1688
        %2006 = vmatpush.bf16.msra.mxu0 %v1684
        %2007 = vmatpush.bf16.msra.mxu0 %v1680
        %2008 = vmatpush.bf16.msra.mxu0 %v1676
        %2009 = vmatpush.bf16.msra.mxu0 %v1672
        %2010 = vmatpush.bf16.msra.mxu0 %v1668
        %2011 = vmatpush.bf16.msra.mxu0 %v1664
        %2012 = vmatmul.bf16.gmra.mxu0 %v1964
        %v2013 = vpop.f32.mrf.mxu0
        %v2014 = vadd.f32 0.0, %v2013
        %v2015 = vpop.f32.mrf.mxu0
        %2016 = vdwg.mxu0
        %v2017 = vadd.f32 %v1469, %v1975
        %v2018 = vadd.f32 %v1488, %v1988
        %v2019 = vadd.f32 %v1507, %v2001
        %v2020 = vadd.f32 %v1526, %v2014
        %v2021 = vxor.u32 %v2017, 2147483648
        %v2022 = vmul.f32 %v2021, 1.442695
        %v2023 = vpow.pop %v2022
        %v2024 = vadd.f32 %v2023, 1.0
        %v2025 = vrcp.pop %v2024
        %v2026 = vmul.f32 %v2024, %v2025
        %v2027 = vsub.f32 1.0, %v2026
        %v2028 = vmul.f32 %v2025, %v2027
        %v2029 = vadd.f32 %v2025, %v2028
        %vm2030 = vweird.f32 %v2024
        %vm2031 = vweird.f32 %v2025
        %vm2032 = vmor %vm2030, %vm2031
        %v2033 = vsel %vm2032, %v2025, %v2029
        %v2034 = vand.u32 2147483647, %v2024
        %vm2035 = vcmp.eq.f32.partialorder %v2034, 8.507059e+37
        %v2036 = vand.u32 %v2024, 2147483648
        %v2037 = vor.u32 1.1754944e-38, %v2036
        %v2038 = vsel %vm2035, %v2037, %v2033
        %v2039 = vmul.f32 1.0, %v2038
        %v2040 = vxor.u32 %v2018, 2147483648
        %v2041 = vmul.f32 %v2040, 1.442695
        %v2042 = vpow.pop %v2041
        %v2043 = vadd.f32 %v2042, 1.0
        %v2044 = vrcp.pop %v2043
        %v2045 = vmul.f32 %v2043, %v2044
        %v2046 = vsub.f32 1.0, %v2045
        %v2047 = vmul.f32 %v2044, %v2046
        %v2048 = vadd.f32 %v2044, %v2047
        %vm2049 = vweird.f32 %v2043
        %vm2050 = vweird.f32 %v2044
        %vm2051 = vmor %vm2049, %vm2050
        %v2052 = vsel %vm2051, %v2044, %v2048
        %v2053 = vand.u32 2147483647, %v2043
        %vm2054 = vcmp.eq.f32.partialorder %v2053, 8.507059e+37
        %v2055 = vand.u32 %v2043, 2147483648
        %v2056 = vor.u32 1.1754944e-38, %v2055
        %v2057 = vsel %vm2054, %v2056, %v2052
        %v2058 = vmul.f32 1.0, %v2057
        %v2059 = vtanh.pop %v2019
        %v2060 = vxor.u32 %v2020, 2147483648
        %v2061 = vmul.f32 %v2060, 1.442695
        %v2062 = vpow.pop %v2061
        %v2063 = vadd.f32 %v2062, 1.0
        %v2064 = vrcp.pop %v2063
        %v2065 = vmul.f32 %v2063, %v2064
        %v2066 = vsub.f32 1.0, %v2065
        %v2067 = vmul.f32 %v2064, %v2066
        %v2068 = vadd.f32 %v2064, %v2067
        %vm2069 = vweird.f32 %v2063
        %vm2070 = vweird.f32 %v2064
        %vm2071 = vmor %vm2069, %vm2070
        %v2072 = vsel %vm2071, %v2064, %v2068
        %v2073 = vand.u32 2147483647, %v2063
        %vm2074 = vcmp.eq.f32.partialorder %v2073, 8.507059e+37
        %v2075 = vand.u32 %v2063, 2147483648
        %v2076 = vor.u32 1.1754944e-38, %v2075
        %v2077 = vsel %vm2074, %v2076, %v2072
        %v2078 = vmul.f32 1.0, %v2077
        %v2079 = vmul.f32 %v2058, %v1961
        %v2080 = vmul.f32 %v2039, %v2059
        %v2081 = vadd.f32 %v2079, %v2080
        %v2082 = vtanh.pop %v2081
        %v2083 = vmul.f32 %v2078, %v2082
        %v2084 = vpack.c.bf16 %v2083, %v2083
        %2085 = vmatpush.bf16.msra.mxu0 %v1689
        %2086 = vmatpush.bf16.msra.mxu0 %v1685
        %2087 = vmatpush.bf16.msra.mxu0 %v1681
        %2088 = vmatpush.bf16.msra.mxu0 %v1677
        %2089 = vmatpush.bf16.msra.mxu0 %v1673
        %2090 = vmatpush.bf16.msra.mxu0 %v1669
        %2091 = vmatpush.bf16.msra.mxu0 %v1665
        %2092 = vmatpush.bf16.msra.mxu0 %v1661
        %2093 = vmatmul.bf16.gmra.mxu0 %v2084
        %v2094 = vpop.f32.mrf.mxu0
        %v2095 = vadd.f32 0.0, %v2094
        %v2096 = vpop.f32.mrf.mxu0
        %2097 = vdwg.mxu0
        %2098 = vmatpush.bf16.msra.mxu0 %v1690
        %2099 = vmatpush.bf16.msra.mxu0 %v1686
        %2100 = vmatpush.bf16.msra.mxu0 %v1682
        %2101 = vmatpush.bf16.msra.mxu0 %v1678
        %2102 = vmatpush.bf16.msra.mxu0 %v1674
        %2103 = vmatpush.bf16.msra.mxu0 %v1670
        %2104 = vmatpush.bf16.msra.mxu0 %v1666
        %2105 = vmatpush.bf16.msra.mxu0 %v1662
        %2106 = vmatmul.bf16.gmra.mxu0 %v2084
        %v2107 = vpop.f32.mrf.mxu0
        %v2108 = vadd.f32 0.0, %v2107
        %v2109 = vpop.f32.mrf.mxu0
        %2110 = vdwg.mxu0
        %2111 = vmatpush.bf16.msra.mxu0 %v1691
        %2112 = vmatpush.bf16.msra.mxu0 %v1687
        %2113 = vmatpush.bf16.msra.mxu0 %v1683
        %2114 = vmatpush.bf16.msra.mxu0 %v1679
        %2115 = vmatpush.bf16.msra.mxu0 %v1675
        %2116 = vmatpush.bf16.msra.mxu0 %v1671
        %2117 = vmatpush.bf16.msra.mxu0 %v1667
        %2118 = vmatpush.bf16.msra.mxu0 %v1663
        %2119 = vmatmul.bf16.gmra.mxu0 %v2084
        %v2120 = vpop.f32.mrf.mxu0
        %v2121 = vadd.f32 0.0, %v2120
        %v2122 = vpop.f32.mrf.mxu0
        %2123 = vdwg.mxu0
        %2124 = vmatpush.bf16.msra.mxu0 %v1692
        %2125 = vmatpush.bf16.msra.mxu0 %v1688
        %2126 = vmatpush.bf16.msra.mxu0 %v1684
        %2127 = vmatpush.bf16.msra.mxu0 %v1680
        %2128 = vmatpush.bf16.msra.mxu0 %v1676
        %2129 = vmatpush.bf16.msra.mxu0 %v1672
        %2130 = vmatpush.bf16.msra.mxu0 %v1668
        %2131 = vmatpush.bf16.msra.mxu0 %v1664
        %2132 = vmatmul.bf16.gmra.mxu0 %v2084
        %v2133 = vpop.f32.mrf.mxu0
        %v2134 = vadd.f32 0.0, %v2133
        %v2135 = vpop.f32.mrf.mxu0
        %2136 = vdwg.mxu0
        %v2137 = vadd.f32 %v1471, %v2095
        %v2138 = vadd.f32 %v1490, %v2108
        %v2139 = vadd.f32 %v1509, %v2121
        %v2140 = vadd.f32 %v1528, %v2134
        %v2141 = vxor.u32 %v2137, 2147483648
        %v2142 = vmul.f32 %v2141, 1.442695
        %v2143 = vpow.pop %v2142
        %v2144 = vadd.f32 %v2143, 1.0
        %v2145 = vrcp.pop %v2144
        %v2146 = vmul.f32 %v2144, %v2145
        %v2147 = vsub.f32 1.0, %v2146
        %v2148 = vmul.f32 %v2145, %v2147
        %v2149 = vadd.f32 %v2145, %v2148
        %vm2150 = vweird.f32 %v2144
        %vm2151 = vweird.f32 %v2145
        %vm2152 = vmor %vm2150, %vm2151
        %v2153 = vsel %vm2152, %v2145, %v2149
        %v2154 = vand.u32 2147483647, %v2144
        %vm2155 = vcmp.eq.f32.partialorder %v2154, 8.507059e+37
        %v2156 = vand.u32 %v2144, 2147483648
        %v2157 = vor.u32 1.1754944e-38, %v2156
        %v2158 = vsel %vm2155, %v2157, %v2153
        %v2159 = vmul.f32 1.0, %v2158
        %v2160 = vxor.u32 %v2138, 2147483648
        %v2161 = vmul.f32 %v2160, 1.442695
        %v2162 = vpow.pop %v2161
        %v2163 = vadd.f32 %v2162, 1.0
        %v2164 = vrcp.pop %v2163
        %v2165 = vmul.f32 %v2163, %v2164
        %v2166 = vsub.f32 1.0, %v2165
        %v2167 = vmul.f32 %v2164, %v2166
        %v2168 = vadd.f32 %v2164, %v2167
        %vm2169 = vweird.f32 %v2163
        %vm2170 = vweird.f32 %v2164
        %vm2171 = vmor %vm2169, %vm2170
        %v2172 = vsel %vm2171, %v2164, %v2168
        %v2173 = vand.u32 2147483647, %v2163
        %vm2174 = vcmp.eq.f32.partialorder %v2173, 8.507059e+37
        %v2175 = vand.u32 %v2163, 2147483648
        %v2176 = vor.u32 1.1754944e-38, %v2175
        %v2177 = vsel %vm2174, %v2176, %v2172
        %v2178 = vmul.f32 1.0, %v2177
        %v2179 = vtanh.pop %v2139
        %v2180 = vxor.u32 %v2140, 2147483648
        %v2181 = vmul.f32 %v2180, 1.442695
        %v2182 = vpow.pop %v2181
        %v2183 = vadd.f32 %v2182, 1.0
        %v2184 = vrcp.pop %v2183
        %v2185 = vmul.f32 %v2183, %v2184
        %v2186 = vsub.f32 1.0, %v2185
        %v2187 = vmul.f32 %v2184, %v2186
        %v2188 = vadd.f32 %v2184, %v2187
        %vm2189 = vweird.f32 %v2183
        %vm2190 = vweird.f32 %v2184
        %vm2191 = vmor %vm2189, %vm2190
        %v2192 = vsel %vm2191, %v2184, %v2188
        %v2193 = vand.u32 2147483647, %v2183
        %vm2194 = vcmp.eq.f32.partialorder %v2193, 8.507059e+37
        %v2195 = vand.u32 %v2183, 2147483648
        %v2196 = vor.u32 1.1754944e-38, %v2195
        %v2197 = vsel %vm2194, %v2196, %v2192
        %v2198 = vmul.f32 1.0, %v2197
        %v2199 = vmul.f32 %v2178, %v2081
        %v2200 = vmul.f32 %v2159, %v2179
        %v2201 = vadd.f32 %v2199, %v2200
        %v2202 = vtanh.pop %v2201
        %v2203 = vmul.f32 %v2198, %v2202
        %2204 = vst [vmem:[#allocation4] sm:$0xff] %v2203
        %2205 = vst [vmem:[#allocation5] sm:$0xff] %v2201
        %v2206 = vpack.c.bf16 %v1963, %v1843
        %v2207 = vpack.c.bf16 %v2203, %v2083
        %v2208 = vld [vmem:[%s7] sm:$0xf]
        %v2209 = vld [vmem:[%s7 + $0x4] sm:$0xf]
        %v2210 = vld [vmem:[%s7 + $0x8] sm:$0xf]
        %v2211 = vld [vmem:[%s7 + $0xc] sm:$0xf]
        %v2212 = vld [vmem:[%s7 + $0x10] sm:$0xf]
        %v2213 = vld [vmem:[%s7 + $0x14] sm:$0xf]
        %v2214 = vld [vmem:[%s7 + $0x18] sm:$0xf]
        %v2215 = vld [vmem:[%s7 + $0x1c] sm:$0xf]
        %v2216 = vld [vmem:[%s7 + $0x20] sm:$0xf]
        %v2217 = vld [vmem:[%s7 + $0x24] sm:$0xf]
        %v2218 = vld [vmem:[%s7 + $0x28] sm:$0xf]
        %v2219 = vld [vmem:[%s7 + $0x2c] sm:$0xf]
        %v2220 = vld [vmem:[%s7 + $0x30] sm:$0xf]
        %v2221 = vld [vmem:[%s7 + $0x34] sm:$0xf]
        %v2222 = vld [vmem:[%s7 + $0x38] sm:$0xf]
        %v2223 = vld [vmem:[%s7 + $0x3c] sm:$0xf]
        %v2224 = vld [vmem:[%s8] sm:$0x1]
        %v2226 = vperm.slane %v2224, 0
        %v2244 = vunpack.c.l.b16 %v2208
        %v2245 = vunpack.c.l.b16 %v2209
        %v2246 = vunpack.c.l.b16 %v2210
        %v2247 = vunpack.c.l.b16 %v2211
        %v2248 = vunpack.c.l.b16 %v2212
        %v2249 = vunpack.c.l.b16 %v2213
        %v2250 = vunpack.c.l.b16 %v2214
        %v2251 = vunpack.c.l.b16 %v2215
        %v2252 = vunpack.c.l.b16 %v2216
        %v2253 = vunpack.c.l.b16 %v2217
        %v2254 = vunpack.c.l.b16 %v2218
        %v2255 = vunpack.c.l.b16 %v2219
        %v2256 = vunpack.c.l.b16 %v2220
        %v2257 = vunpack.c.l.b16 %v2221
        %v2258 = vunpack.c.l.b16 %v2222
        %v2259 = vunpack.c.l.b16 %v2223
        %v2260 = vpack.c.b16 %v2245, %v2244
        %v2261 = vpack.c.b16 %v2247, %v2246
        %v2262 = vpack.c.b16 %v2249, %v2248
        %v2263 = vpack.c.b16 %v2251, %v2250
        %v2264 = vpack.c.b16 %v2253, %v2252
        %v2265 = vpack.c.b16 %v2255, %v2254
        %v2266 = vpack.c.b16 %v2257, %v2256
        %v2267 = vpack.c.b16 %v2259, %v2258
        %2276 = vmatpush.bf16.msra.mxu0 %v2267
        %2277 = vmatpush.bf16.msra.mxu0 %v2266
        %2278 = vmatpush.bf16.msra.mxu0 %v2265
        %2279 = vmatpush.bf16.msra.mxu0 %v2264
        %2280 = vmatpush.bf16.msra.mxu0 %v2263
        %2281 = vmatpush.bf16.msra.mxu0 %v2262
        %2282 = vmatpush.bf16.msra.mxu0 %v2261
        %2283 = vmatpush.bf16.msra.mxu0 %v2260
        %2284 = vmatmul.bf16.gmra.mxu0 %v2206
        %v2285 = vpop.f32.mrf.mxu0
        %v2286 = vadd.f32 %v2226, %v2285
        %v2287 = vpop.f32.mrf.mxu0
        %v2288 = vadd.f32 %v2226, %v2287
        %2289 = vmatmul.bf16.gmra.mxu0 %v2207
        %v2290 = vpop.f32.mrf.mxu0
        %v2291 = vadd.f32 %v2226, %v2290
        %v2292 = vpop.f32.mrf.mxu0
        %v2293 = vadd.f32 %v2226, %v2292
        %2294 = vdwg.mxu0
        %2295 = vst [vmem:[%s368] sm:$0xff] %v2286
        %2296 = vst [vmem:[%s368 + $0x8] sm:$0xff] %v2288
        %2297 = vst [vmem:[%s368 + $0x10] sm:$0xff] %v2291
        %2298 = vst [vmem:[%s368 + $0x18] sm:$0xff] %v2293
        %s2299 = smul.u32 4, %s22
        %p2300 = scmp.lt.s32.totalorder %s2299, 7
        %s2301 = scalar_select %p2300, %s2299, 7
        %s2302 = smul.addr %s2301, 8
        %s2303 = scalar_lea.vmem %s9, %s2302
        // Predicated region
        $region69: #{autocomplete_forward.1} parent=55 // pred_check
          %p2304 = pneg %p234
        $region70: #{autocomplete_forward.1} parent=55 // pred_check_branch
          %2306 = sbr.rel (%p2304) target = $region72
        $region71: #{autocomplete_forward.1} parent=55 // pred_region
          %s2307 = smul.u32 4, %s22
        $region72: #{autocomplete_forward.1} parent=55 // pred_fallthru
          _
      $region56: #{autocomplete_forward.1} parent=5 // pred_fallthru
        _
      %p2308 = scmp.le.s32.totalorder 2, %s17
      // Predicated region
      $region73: #{autocomplete_forward.1} parent=5 // pred_check
        %p2309 = pneg %p2308
      $region74: #{autocomplete_forward.1} parent=5 // pred_check_branch
        %2311 = sbr.rel (%p2309) target = $region76
      $region75: #{autocomplete_forward.1} parent=5 // pred_region
        %s2312 = ssub.s32 %s17, 2
        // Predicated region
        $region77: #{autocomplete_forward.1} parent=75 // pred_check
          %p2313 = pneg %p240
        $region78: #{autocomplete_forward.1} parent=75 // pred_check_branch
          %2315 = sbr.rel (%p2313) target = $region80
        $region79: #{autocomplete_forward.1} parent=75 // pred_region
          %s2316 = smul.u32 4, %s23
          %p2317 = scmp.lt.s32.totalorder %s2316, 7
          %s2318 = scalar_select %p2317, %s2316, 7
          %s2319 = smul.addr %s2318, 8
          %s2320 = scalar_lea.vmem %s9, %s2319
        $region80: #{autocomplete_forward.1} parent=75 // pred_fallthru
          _
      $region76: #{autocomplete_forward.1} parent=5 // pred_fallthru
        _
    $region6: #{autocomplete_forward.1} parent=1 // loop_footer
      %s21 = sadd.s32 1, %s17
    $region7: #{autocomplete_forward.1} parent=1 // loop_footer_branch
      %16 = sbr.rel target = $region3
    $region8: #{autocomplete_forward.1} parent=1 // loop_exit
      _
    %2321 = vsyncpa [#allocation7], 1
    %s2322 = scalar_lea.sflag [#allocation7], 1
    %2323 = vsyncpa %s2322, 1
    %2324 = vsyncpa [#allocation9], 1

</llo_original>
